<compile_context>
chip_gen: v6e
topology: v6e:2x2x1
jax: 0.10.0
libtpu: 0.0.40
codegen_flags: <defaults>
</compile_context>

<pallas_src>
import functools
import math

import jax
import jax.numpy as jnp
from jax import lax
from jax.experimental import pallas as pl
from jax.experimental.pallas import tpu as pltpu


def _multi_attn_kernel(key_ref, query_ref, value_ref,
                       wk_ref, wq_ref, wv_ref,
                       *out_and_scratch,
                       num_head, dim_k, dim_v, len_k, with_attn):
    if with_attn:
        attn_ref, ctx_ref, k_scr, v_scr = out_and_scratch
    else:
        ctx_ref, k_scr, v_scr = out_and_scratch
        attn_ref = None

    qi = pl.program_id(1)

    # K/V projections depend only on the batch index -> compute once per batch
    # (first q-tile) and keep them resident in bf16 VMEM scratch.
    @pl.when(qi == 0)
    def _project_kv():
        kb = key_ref[0].astype(jnp.bfloat16)                 # [Lk, dk_in]
        vb = value_ref[0].astype(jnp.bfloat16)               # [Lv, dv_in]
        k_scr[...] = jnp.dot(kb, wk_ref[...],
                             preferred_element_type=jnp.float32
                             ).astype(jnp.bfloat16)          # [Lk, H*dim_k]
        v_scr[...] = jnp.dot(vb, wv_ref[...],
                             preferred_element_type=jnp.float32
                             ).astype(jnp.bfloat16)          # [Lv, H*dim_v]

    # Per-q-tile projection.  1/sqrt(dim_k) was folded into wq in the wrapper.
    qb = query_ref[0].astype(jnp.bfloat16)                   # [tq, dk_in]
    q_all = jnp.dot(qb, wq_ref[...],
                    preferred_element_type=jnp.float32)      # [tq, H*dim_k]
    q_all_b = q_all.astype(jnp.bfloat16)                     # single whole-slab cast

    k_all = k_scr[...]                                       # bf16 [Lk, H*dim_k]
    v_all = v_scr[...]                                       # bf16 [Lv, H*dim_v]

    inv_len_k = 1.0 / float(len_k)
    for h in range(num_head):                                # small static unroll
        qh = q_all_b[:, h * dim_k:(h + 1) * dim_k]           # [tq, dim_k]
        kh = k_all[:, h * dim_k:(h + 1) * dim_k]             # [Lk, dim_k]
        vh = v_all[:, h * dim_v:(h + 1) * dim_v]             # [Lk, dim_v]

        # scores = qh @ kh^T without materializing a transpose.
        scores = lax.dot_general(
            qh, kh, dimension_numbers=(((1,), (1,)), ((), ())),
            preferred_element_type=jnp.float32)              # [tq, Lk]

        # Numerically-stable softmax in f32; divide via EUP reciprocal.
        m = jnp.max(scores, axis=-1, keepdims=True)
        e = jnp.exp(scores - m)
        inv_sum = pl.reciprocal(jnp.sum(e, axis=-1, keepdims=True), approx=True)
        attn = e * inv_sum                                   # [tq, Lk]

        if with_attn:
            attn_ref[0, h] = attn.astype(attn_ref.dtype)

        # emb_aggregator: mean over keys of attn[:,:,None] * v == (attn @ v) / len_k.
        # Per-head direct store (no ctx_parts / concatenate).
        ctx_ref[0, :, h * dim_v:(h + 1) * dim_v] = (
            jnp.dot(attn.astype(jnp.bfloat16), vh,
                    preferred_element_type=jnp.float32) * inv_len_k
        ).astype(ctx_ref.dtype)


def _vmem_capacity_bytes():
    try:
        return int(pltpu.get_tpu_info().vmem_capacity_bytes)
    except Exception:
        return 64 << 20   # conservative fallback: v7x per-TC VMEM


def _pick_block_q(len_q, len_k, num_head, vmem_cap):
    """Largest block_q that (a) divides len_q, (b) is a multiple of 8 (or the full
    length), and (c) keeps the double-buffered f32 attn tile within ~40% of VMEM."""
    attn_budget = int(0.4 * vmem_cap)
    per_row = 2 * num_head * len_k * 4          # double-buffered f32 bytes per q-row
    cap = max(1, attn_budget // max(per_row, 1))
    cap = min(cap, 512, len_q)
    if cap >= len_q:
        return len_q
    for d in range(cap, 0, -1):
        if len_q % d == 0 and d % 8 == 0:
            return d
    # TODO(synk): no 8-aligned divisor below the VMEM cap -> fall back to one full
    # tile (could pad/mask the last q-tile instead for pathological len_q).
    return len_q


def multi_attn(key, query, value, wk, wq, wv, *,
               num_head, dim_k, dim_v, block_q=None, return_attn=True):
    """key/query/value: [B, L, F]; wk/wq: [dk_in, H*dim_k]; wv: [dv_in, H*dim_v].

    Returns (attn_v [B, Lq, H*dim_v], attn [B, H, Lq, Lk]) like the PyTorch module
    (attn is None when return_attn=False, skipping the dominant HBM writeback).
    """
    B, len_k, dk_in = key.shape
    _, len_q, _ = query.shape
    _, len_v, dv_in = value.shape
    assert len_k == len_v, "attn*value expansion requires len_k == len_v"
    H = num_head
    assert wk.shape == (dk_in, H * dim_k)
    assert wq.shape == (dk_in, H * dim_k)
    assert wv.shape == (dv_in, H * dim_v)

    vmem_cap = _vmem_capacity_bytes()
    if block_q is None:
        block_q = _pick_block_q(len_q, len_k, H, vmem_cap)
    assert len_q % block_q == 0

    # One-time weight prep: bf16 weights + 1/sqrt(dim_k) folded into wq.
    scale = 1.0 / math.sqrt(dim_k)
    wk_b = wk.astype(jnp.bfloat16)
    wq_b = (wq * scale).astype(jnp.bfloat16)
    wv_b = wv.astype(jnp.bfloat16)

    kern = functools.partial(_multi_attn_kernel, num_head=H, dim_k=dim_k,
                             dim_v=dim_v, len_k=len_k, with_attn=return_attn)

    out_shape = [jax.ShapeDtypeStruct((B, len_q, H * dim_v), jnp.float32)]
    out_specs = [pl.BlockSpec((1, block_q, H * dim_v), lambda b, qi: (b, qi, 0))]
    if return_attn:
        out_shape = [jax.ShapeDtypeStruct((B, H, len_q, len_k), jnp.float32)] + out_shape
        out_specs = [pl.BlockSpec((1, H, block_q, len_k),
                                  lambda b, qi: (b, 0, qi, 0))] + out_specs

    # Rough per-step VMEM footprint (bytes) -> raise the scoped VMEM limit with
    # headroom (defaults are 16 MiB v5e / 32 MiB v6e,v7x; physical 128/128/64 MiB).
    est = (2 * H * block_q * len_k * 4 * (1 if return_attn else 0)   # attn out tile
           + 2 * block_q * H * dim_v * 4                             # ctx out tile
           + 2 * block_q * dk_in * 4                                 # query tile
           + 2 * len_k * dk_in * 4                                   # key block
           + 2 * len_v * dv_in * 4                                   # value block
           + 2 * (2 * dk_in * H * dim_k + dv_in * H * dim_v) * 2     # bf16 weights
           + (len_k * H * dim_k + len_v * H * dim_v) * 2)            # bf16 K/V scratch
    vmem_limit = int(min(max(est * 5 // 4 + (4 << 20), 32 << 20),
                         int(0.9 * vmem_cap)))

    flops = 2 * B * (len_k * dk_in * H * dim_k
                     + len_q * dk_in * H * dim_k
                     + len_v * dv_in * H * dim_v
                     + H * len_q * len_k * (dim_k + dim_v))
    bytes_accessed = (4 * (key.size + query.size + value.size
                           + B * len_q * H * dim_v
                           + (B * H * len_q * len_k if return_attn else 0))
                      + 2 * (wk.size + wq.size + wv.size))

    outs = pl.pallas_call(
        kern,
        out_shape=tuple(out_shape),
        grid_spec=pltpu.PrefetchScalarGridSpec(
            num_scalar_prefetch=0,
            grid=(B, len_q // block_q),
            in_specs=[
                # qi-constant index_maps -> key/value DMA'd once per batch.
                pl.BlockSpec((1, len_k, dk_in), lambda b, qi: (b, 0, 0)),
                pl.BlockSpec((1, block_q, dk_in), lambda b, qi: (b, qi, 0)),
                pl.BlockSpec((1, len_v, dv_in), lambda b, qi: (b, 0, 0)),
                # Full bf16 weight slabs, constant index -> loaded once, stay resident.
                pl.BlockSpec((dk_in, H * dim_k), lambda b, qi: (0, 0)),
                pl.BlockSpec((dk_in, H * dim_k), lambda b, qi: (0, 0)),
                pl.BlockSpec((dv_in, H * dim_v), lambda b, qi: (0, 0)),
            ],
            out_specs=out_specs,
            scratch_shapes=[
                pltpu.VMEM((len_k, H * dim_k), jnp.bfloat16),   # projected K (resident)
                pltpu.VMEM((len_v, H * dim_v), jnp.bfloat16),   # projected V (resident)
            ],
        ),
        compiler_params=pltpu.CompilerParams(
            # batch axis parallel (megacore on v7x when B>=2); qi axis must be
            # "arbitrary" so the K/V scratch persists across q-tiles of a batch.
            dimension_semantics=("parallel", "arbitrary"),
            vmem_limit_bytes=vmem_limit),
        cost_estimate=pl.CostEstimate(
            flops=flops,
            transcendentals=B * H * len_q * len_k,
            bytes_accessed=bytes_accessed),
    )(key, query, value, wk_b, wq_b, wv_b)

    if return_attn:
        attn, attn_v = outs
        return attn_v, attn
    (attn_v,) = outs
    return attn_v, None


if __name__ == "__main__":
    # Small shapes consistent with the module's forward.
    B = 2
    len_k = len_q = len_v = 8
    dim_k_in = 32
    dim_v_in = 32
    dim_k = 16
    dim_v = 16
    num_head = 4

    root = jax.random.PRNGKey(0)
    k_key, k_query, k_value, k_wk, k_wq, k_wv = jax.random.split(root, 6)

    key = jax.random.normal(k_key, (B, len_k, dim_k_in), jnp.float32)
    query = jax.random.normal(k_query, (B, len_q, dim_k_in), jnp.float32)
    value = jax.random.normal(k_value, (B, len_v, dim_v_in), jnp.float32)

    # nn.Linear weights with their [out_features, in_features] shape.
    Wk = jax.random.normal(k_wk, (num_head * dim_k, dim_k_in), jnp.float32) * 0.1
    Wq = jax.random.normal(k_wq, (num_head * dim_k, dim_k_in), jnp.float32) * 0.1
    Wv = jax.random.normal(k_wv, (num_head * dim_v, dim_v_in), jnp.float32) * 0.1

    # Kernel takes the x @ W.T layout: [F_in, H*D]; column block h*D:(h+1)*D is head h,
    # matching the .view(B, L, H, D) split in the PyTorch module.
    wk = Wk.T
    wq = Wq.T
    wv = Wv.T

    attn_v, attn = multi_attn(key, query, value, wk, wq, wv,
                              num_head=num_head, dim_k=dim_k, dim_v=dim_v)
    jax.block_until_ready((attn_v, attn))

    # Pure-JAX (f32) reference of the PyTorch forward for a correctness check.
    def ref_fwd(key, query, value):
        k = (key @ Wk.T).reshape(B, len_k, num_head, dim_k).transpose(0, 2, 1, 3)
        q = (query @ Wq.T).reshape(B, len_q, num_head, dim_k).transpose(0, 2, 1, 3)
        v = (value @ Wv.T).reshape(B, len_v, num_head, dim_v).transpose(0, 2, 1, 3)
        a = jax.nn.softmax(
            jnp.einsum('bhqd,bhkd->bhqk', q / dim_k ** 0.5, k), axis=-1)
        ctx = jnp.einsum('bhqk,bhkd->bhqd', a, v) / len_k
        out = ctx.transpose(0, 2, 1, 3).reshape(B, len_q, num_head * dim_v)
        return out, a

    ref_v, ref_a = ref_fwd(key, query, value)
    # bf16 MXU operands (f32 accumulation) + approx reciprocal -> loosened tolerance.
    assert jnp.allclose(attn_v, ref_v, atol=2e-2, rtol=2e-2), \
        float(jnp.max(jnp.abs(attn_v - ref_v)))
    assert jnp.allclose(attn, ref_a, atol=2e-2, rtol=2e-2), \
        float(jnp.max(jnp.abs(attn - ref_a)))

    # Also exercise the attn-matrix-free fast path (skips dominant HBM writeback).
    attn_v_only, attn_none = multi_attn(key, query, value, wk, wq, wv,
                                        num_head=num_head, dim_k=dim_k, dim_v=dim_v,
                                        return_attn=False)
    jax.block_until_ready(attn_v_only)
    assert attn_none is None
    assert jnp.allclose(attn_v_only, ref_v, atol=2e-2, rtol=2e-2)

    print("KERNEL_OK")
</pallas_src>

<mosaic_0001>
module attributes {stable_mosaic.version = 11 : i64} {
  func.func @_multi_attn_kernel(%arg0: i32, %arg1: i32, %arg2: memref<1x8x32xf32, #tpu.memory_space<vmem>>, %arg3: memref<1x8x32xf32, #tpu.memory_space<vmem>>, %arg4: memref<1x8x32xf32, #tpu.memory_space<vmem>>, %arg5: memref<32x64xbf16, #tpu.memory_space<vmem>>, %arg6: memref<32x64xbf16, #tpu.memory_space<vmem>>, %arg7: memref<32x64xbf16, #tpu.memory_space<vmem>>, %arg8: memref<1x4x8x8xf32, #tpu.memory_space<vmem>>, %arg9: memref<1x8x64xf32, #tpu.memory_space<vmem>>, %arg10: memref<8x64xbf16, #tpu.memory_space<vmem>>, %arg11: memref<8x64xbf16, #tpu.memory_space<vmem>>) attributes {dimension_semantics = [#tpu.dimension_semantics<parallel>, #tpu.dimension_semantics<arbitrary>], iteration_bounds = array<i64: 2, 1>, scalar_prefetch = 0 : i64, scratch_operands = 2 : i64, tpu.core_type = #tpu.core_type<tc>, window_params = [{transform_indices = @transform_0, window_bounds = array<i64: 1, 8, 32>}, {transform_indices = @transform_1, window_bounds = array<i64: 1, 8, 32>}, {transform_indices = @transform_2, window_bounds = array<i64: 1, 8, 32>}, {pipeline_mode = #tpu.pipeline_mode<synchronous>, transform_indices = @transform_3, window_bounds = array<i64: 32, 64>}, {pipeline_mode = #tpu.pipeline_mode<synchronous>, transform_indices = @transform_4, window_bounds = array<i64: 32, 64>}, {pipeline_mode = #tpu.pipeline_mode<synchronous>, transform_indices = @transform_5, window_bounds = array<i64: 32, 64>}, {transform_indices = @transform_6, window_bounds = array<i64: 1, 4, 8, 8>}, {transform_indices = @transform_7, window_bounds = array<i64: 1, 8, 64>}]} {
    %c0_i32 = arith.constant 0 : i32
    %0 = arith.cmpi eq, %arg1, %c0_i32 : i32
    %1 = arith.extui %0 : i1 to i32
    %c0_i32_0 = arith.constant 0 : i32
    %2 = arith.cmpi ne, %1, %c0_i32_0 : i32
    scf.if %2 {
      %c0_51 = arith.constant 0 : index
      %c0_52 = arith.constant 0 : index
      %c0_53 = arith.constant 0 : index
      %107 = vector.load %arg2[%c0_51, %c0_52, %c0_53] : memref<1x8x32xf32, #tpu.memory_space<vmem>>, vector<1x8x32xf32>
      %108 = vector.shape_cast %107 : vector<1x8x32xf32> to vector<8x32xf32>
      %109 = arith.truncf %108 : vector<8x32xf32> to vector<8x32xbf16>
      %c0_54 = arith.constant 0 : index
      %c0_55 = arith.constant 0 : index
      %c0_56 = arith.constant 0 : index
      %110 = vector.load %arg4[%c0_54, %c0_55, %c0_56] : memref<1x8x32xf32, #tpu.memory_space<vmem>>, vector<1x8x32xf32>
      %111 = vector.shape_cast %110 : vector<1x8x32xf32> to vector<8x32xf32>
      %112 = arith.truncf %111 : vector<8x32xf32> to vector<8x32xbf16>
      %c0_57 = arith.constant 0 : index
      %c0_58 = arith.constant 0 : index
      %113 = vector.load %arg5[%c0_57, %c0_58] : memref<32x64xbf16, #tpu.memory_space<vmem>>, vector<32x64xbf16>
      %cst_59 = arith.constant dense<0.000000e+00> : vector<8x64xf32>
      %114 = tpu.matmul %109, %113, %cst_59 {dimension_numbers = #tpu.dot_dimension_numbers<[1], [0], [0], [1], [0, 0, 1, 1], [], []>} : vector<8x32xbf16>, vector<32x64xbf16>, vector<8x64xf32> -> vector<8x64xf32>
      %115 = arith.truncf %114 : vector<8x64xf32> to vector<8x64xbf16>
      %c0_60 = arith.constant 0 : index
      %c0_61 = arith.constant 0 : index
      %116 = vector.load %arg10[%c0_60, %c0_61] : memref<8x64xbf16, #tpu.memory_space<vmem>>, vector<8x64xbf16>
      tpu.vector_store %arg10[%c0_60, %c0_61], %115 {strides = array<i32>} : memref<8x64xbf16, #tpu.memory_space<vmem>>, vector<8x64xbf16>,
      %c0_62 = arith.constant 0 : index
      %c0_63 = arith.constant 0 : index
      %117 = vector.load %arg7[%c0_62, %c0_63] : memref<32x64xbf16, #tpu.memory_space<vmem>>, vector<32x64xbf16>
      %cst_64 = arith.constant dense<0.000000e+00> : vector<8x64xf32>
      %118 = tpu.matmul %112, %117, %cst_64 {dimension_numbers = #tpu.dot_dimension_numbers<[1], [0], [0], [1], [0, 0, 1, 1], [], []>} : vector<8x32xbf16>, vector<32x64xbf16>, vector<8x64xf32> -> vector<8x64xf32>
      %119 = arith.truncf %118 : vector<8x64xf32> to vector<8x64xbf16>
      %c0_65 = arith.constant 0 : index
      %c0_66 = arith.constant 0 : index
      %120 = vector.load %arg11[%c0_65, %c0_66] : memref<8x64xbf16, #tpu.memory_space<vmem>>, vector<8x64xbf16>
      tpu.vector_store %arg11[%c0_65, %c0_66], %119 {strides = array<i32>} : memref<8x64xbf16, #tpu.memory_space<vmem>>, vector<8x64xbf16>,
    } else {
    }
    %c0 = arith.constant 0 : index
    %c0_1 = arith.constant 0 : index
    %c0_2 = arith.constant 0 : index
    %3 = vector.load %arg3[%c0, %c0_1, %c0_2] : memref<1x8x32xf32, #tpu.memory_space<vmem>>, vector<1x8x32xf32>
    %4 = vector.shape_cast %3 : vector<1x8x32xf32> to vector<8x32xf32>
    %5 = arith.truncf %4 : vector<8x32xf32> to vector<8x32xbf16>
    %c0_3 = arith.constant 0 : index
    %c0_4 = arith.constant 0 : index
    %6 = vector.load %arg6[%c0_3, %c0_4] : memref<32x64xbf16, #tpu.memory_space<vmem>>, vector<32x64xbf16>
    %cst = arith.constant dense<0.000000e+00> : vector<8x64xf32>
    %7 = tpu.matmul %5, %6, %cst {dimension_numbers = #tpu.dot_dimension_numbers<[1], [0], [0], [1], [0, 0, 1, 1], [], []>} : vector<8x32xbf16>, vector<32x64xbf16>, vector<8x64xf32> -> vector<8x64xf32>
    %8 = arith.truncf %7 : vector<8x64xf32> to vector<8x64xbf16>
    %c0_5 = arith.constant 0 : index
    %c0_6 = arith.constant 0 : index
    %9 = vector.load %arg10[%c0_5, %c0_6] : memref<8x64xbf16, #tpu.memory_space<vmem>>, vector<8x64xbf16>
    %c0_7 = arith.constant 0 : index
    %c0_8 = arith.constant 0 : index
    %10 = vector.load %arg11[%c0_7, %c0_8] : memref<8x64xbf16, #tpu.memory_space<vmem>>, vector<8x64xbf16>
    %11 = vector.extract_strided_slice %8 {offsets = [0, 0], sizes = [8, 16], strides = [1, 1]} : vector<8x64xbf16> to vector<8x16xbf16>
    %12 = vector.extract_strided_slice %9 {offsets = [0, 0], sizes = [8, 16], strides = [1, 1]} : vector<8x64xbf16> to vector<8x16xbf16>
    %13 = vector.extract_strided_slice %10 {offsets = [0, 0], sizes = [8, 16], strides = [1, 1]} : vector<8x64xbf16> to vector<8x16xbf16>
    %cst_9 = arith.constant dense<0.000000e+00> : vector<8x8xf32>
    %14 = tpu.matmul %11, %12, %cst_9 {dimension_numbers = #tpu.dot_dimension_numbers<[1], [1], [0], [0], [0, 0, 1, 0], [], []>} : vector<8x16xbf16>, vector<8x16xbf16>, vector<8x8xf32> -> vector<8x8xf32>
    %cst_10 = arith.constant dense<0xFF800000> : vector<8xf32>
    %15 = vector.multi_reduction <maximumf>, %14, %cst_10 [1] : vector<8x8xf32> to vector<8xf32>
    %16 = vector.shape_cast %15 : vector<8xf32> to vector<8x1xf32>
    %17 = vector.broadcast %16 : vector<8x1xf32> to vector<8x8xf32>
    %18 = arith.subf %14, %17 : vector<8x8xf32>
    %19 = math.exp %18 : vector<8x8xf32>
    %cst_11 = arith.constant dense<0.000000e+00> : vector<8xf32>
    %20 = vector.multi_reduction <add>, %19, %cst_11 [1] : vector<8x8xf32> to vector<8xf32>
    %21 = vector.shape_cast %20 : vector<8xf32> to vector<8x1xf32>
    %22 = tpu.reciprocal %21 {approx = true} : vector<8x1xf32> -> vector<8x1xf32>
    %23 = vector.broadcast %22 : vector<8x1xf32> to vector<8x8xf32>
    %24 = arith.mulf %19, %23 : vector<8x8xf32>
    %c0_12 = arith.constant 0 : index
    %c0_13 = arith.constant 0 : index
    %c0_14 = arith.constant 0 : index
    %c0_15 = arith.constant 0 : index
    %25 = vector.load %arg8[%c0_12, %c0_13, %c0_14, %c0_15] : memref<1x4x8x8xf32, #tpu.memory_space<vmem>>, vector<1x1x8x8xf32>
    %26 = vector.shape_cast %25 : vector<1x1x8x8xf32> to vector<8x8xf32>
    %27 = vector.shape_cast %24 : vector<8x8xf32> to vector<1x1x8x8xf32>
    tpu.vector_store %arg8[%c0_12, %c0_13, %c0_14, %c0_15], %27 {strides = array<i32>} : memref<1x4x8x8xf32, #tpu.memory_space<vmem>>, vector<1x1x8x8xf32>,
    %28 = arith.truncf %24 : vector<8x8xf32> to vector<8x8xbf16>
    %cst_16 = arith.constant dense<0.000000e+00> : vector<8x16xf32>
    %29 = tpu.matmul %28, %13, %cst_16 {dimension_numbers = #tpu.dot_dimension_numbers<[1], [0], [0], [1], [0, 0, 1, 1], [], []>} : vector<8x8xbf16>, vector<8x16xbf16>, vector<8x16xf32> -> vector<8x16xf32>
    %cst_17 = arith.constant 1.250000e-01 : f32
    %30 = vector.broadcast %cst_17 : f32 to vector<8x16xf32>
    %31 = arith.mulf %29, %30 : vector<8x16xf32>
    %c0_18 = arith.constant 0 : index
    %c0_19 = arith.constant 0 : index
    %c0_20 = arith.constant 0 : index
    %32 = vector.load %arg9[%c0_18, %c0_19, %c0_20] : memref<1x8x64xf32, #tpu.memory_space<vmem>>, vector<1x8x16xf32>
    %33 = vector.shape_cast %32 : vector<1x8x16xf32> to vector<8x16xf32>
    %34 = vector.shape_cast %31 : vector<8x16xf32> to vector<1x8x16xf32>
    tpu.vector_store %arg9[%c0_18, %c0_19, %c0_20], %34 {strides = array<i32>} : memref<1x8x64xf32, #tpu.memory_space<vmem>>, vector<1x8x16xf32>,
    %35 = vector.extract_strided_slice %8 {offsets = [0, 16], sizes = [8, 16], strides = [1, 1]} : vector<8x64xbf16> to vector<8x16xbf16>
    %36 = vector.extract_strided_slice %9 {offsets = [0, 16], sizes = [8, 16], strides = [1, 1]} : vector<8x64xbf16> to vector<8x16xbf16>
    %37 = vector.extract_strided_slice %10 {offsets = [0, 16], sizes = [8, 16], strides = [1, 1]} : vector<8x64xbf16> to vector<8x16xbf16>
    %cst_21 = arith.constant dense<0.000000e+00> : vector<8x8xf32>
    %38 = tpu.matmul %35, %36, %cst_21 {dimension_numbers = #tpu.dot_dimension_numbers<[1], [1], [0], [0], [0, 0, 1, 0], [], []>} : vector<8x16xbf16>, vector<8x16xbf16>, vector<8x8xf32> -> vector<8x8xf32>
    %cst_22 = arith.constant dense<0xFF800000> : vector<8xf32>
    %39 = vector.multi_reduction <maximumf>, %38, %cst_22 [1] : vector<8x8xf32> to vector<8xf32>
    %40 = vector.shape_cast %39 : vector<8xf32> to vector<8x1xf32>
    %41 = vector.broadcast %40 : vector<8x1xf32> to vector<8x8xf32>
    %42 = arith.subf %38, %41 : vector<8x8xf32>
    %43 = math.exp %42 : vector<8x8xf32>
    %cst_23 = arith.constant dense<0.000000e+00> : vector<8xf32>
    %44 = vector.multi_reduction <add>, %43, %cst_23 [1] : vector<8x8xf32> to vector<8xf32>
    %45 = vector.shape_cast %44 : vector<8xf32> to vector<8x1xf32>
    %46 = tpu.reciprocal %45 {approx = true} : vector<8x1xf32> -> vector<8x1xf32>
    %47 = vector.broadcast %46 : vector<8x1xf32> to vector<8x8xf32>
    %48 = arith.mulf %43, %47 : vector<8x8xf32>
    %c0_24 = arith.constant 0 : index
    %c1 = arith.constant 1 : index
    %c0_25 = arith.constant 0 : index
    %c0_26 = arith.constant 0 : index
    %49 = vector.load %arg8[%c0_24, %c1, %c0_25, %c0_26] : memref<1x4x8x8xf32, #tpu.memory_space<vmem>>, vector<1x1x8x8xf32>
    %50 = vector.shape_cast %49 : vector<1x1x8x8xf32> to vector<8x8xf32>
    %51 = vector.shape_cast %48 : vector<8x8xf32> to vector<1x1x8x8xf32>
    tpu.vector_store %arg8[%c0_24, %c1, %c0_25, %c0_26], %51 {strides = array<i32>} : memref<1x4x8x8xf32, #tpu.memory_space<vmem>>, vector<1x1x8x8xf32>,
    %52 = arith.truncf %48 : vector<8x8xf32> to vector<8x8xbf16>
    %cst_27 = arith.constant dense<0.000000e+00> : vector<8x16xf32>
    %53 = tpu.matmul %52, %37, %cst_27 {dimension_numbers = #tpu.dot_dimension_numbers<[1], [0], [0], [1], [0, 0, 1, 1], [], []>} : vector<8x8xbf16>, vector<8x16xbf16>, vector<8x16xf32> -> vector<8x16xf32>
    %cst_28 = arith.constant 1.250000e-01 : f32
    %54 = vector.broadcast %cst_28 : f32 to vector<8x16xf32>
    %55 = arith.mulf %53, %54 : vector<8x16xf32>
    %c0_29 = arith.constant 0 : index
    %c0_30 = arith.constant 0 : index
    %c16 = arith.constant 16 : index
    %56 = vector.load %arg9[%c0_29, %c0_30, %c16] : memref<1x8x64xf32, #tpu.memory_space<vmem>>, vector<1x8x16xf32>
    %57 = vector.shape_cast %56 : vector<1x8x16xf32> to vector<8x16xf32>
    %58 = vector.shape_cast %55 : vector<8x16xf32> to vector<1x8x16xf32>
    tpu.vector_store %arg9[%c0_29, %c0_30, %c16], %58 {strides = array<i32>} : memref<1x8x64xf32, #tpu.memory_space<vmem>>, vector<1x8x16xf32>,
    %59 = vector.extract_strided_slice %8 {offsets = [0, 32], sizes = [8, 16], strides = [1, 1]} : vector<8x64xbf16> to vector<8x16xbf16>
    %60 = vector.extract_strided_slice %9 {offsets = [0, 32], sizes = [8, 16], strides = [1, 1]} : vector<8x64xbf16> to vector<8x16xbf16>
    %61 = vector.extract_strided_slice %10 {offsets = [0, 32], sizes = [8, 16], strides = [1, 1]} : vector<8x64xbf16> to vector<8x16xbf16>
    %cst_31 = arith.constant dense<0.000000e+00> : vector<8x8xf32>
    %62 = tpu.matmul %59, %60, %cst_31 {dimension_numbers = #tpu.dot_dimension_numbers<[1], [1], [0], [0], [0, 0, 1, 0], [], []>} : vector<8x16xbf16>, vector<8x16xbf16>, vector<8x8xf32> -> vector<8x8xf32>
    %cst_32 = arith.constant dense<0xFF800000> : vector<8xf32>
    %63 = vector.multi_reduction <maximumf>, %62, %cst_32 [1] : vector<8x8xf32> to vector<8xf32>
    %64 = vector.shape_cast %63 : vector<8xf32> to vector<8x1xf32>
    %65 = vector.broadcast %64 : vector<8x1xf32> to vector<8x8xf32>
    %66 = arith.subf %62, %65 : vector<8x8xf32>
    %67 = math.exp %66 : vector<8x8xf32>
    %cst_33 = arith.constant dense<0.000000e+00> : vector<8xf32>
    %68 = vector.multi_reduction <add>, %67, %cst_33 [1] : vector<8x8xf32> to vector<8xf32>
    %69 = vector.shape_cast %68 : vector<8xf32> to vector<8x1xf32>
    %70 = tpu.reciprocal %69 {approx = true} : vector<8x1xf32> -> vector<8x1xf32>
    %71 = vector.broadcast %70 : vector<8x1xf32> to vector<8x8xf32>
    %72 = arith.mulf %67, %71 : vector<8x8xf32>
    %c0_34 = arith.constant 0 : index
    %c2 = arith.constant 2 : index
    %c0_35 = arith.constant 0 : index
    %c0_36 = arith.constant 0 : index
    %73 = vector.load %arg8[%c0_34, %c2, %c0_35, %c0_36] : memref<1x4x8x8xf32, #tpu.memory_space<vmem>>, vector<1x1x8x8xf32>
    %74 = vector.shape_cast %73 : vector<1x1x8x8xf32> to vector<8x8xf32>
    %75 = vector.shape_cast %72 : vector<8x8xf32> to vector<1x1x8x8xf32>
    tpu.vector_store %arg8[%c0_34, %c2, %c0_35, %c0_36], %75 {strides = array<i32>} : memref<1x4x8x8xf32, #tpu.memory_space<vmem>>, vector<1x1x8x8xf32>,
    %76 = arith.truncf %72 : vector<8x8xf32> to vector<8x8xbf16>
    %cst_37 = arith.constant dense<0.000000e+00> : vector<8x16xf32>
    %77 = tpu.matmul %76, %61, %cst_37 {dimension_numbers = #tpu.dot_dimension_numbers<[1], [0], [0], [1], [0, 0, 1, 1], [], []>} : vector<8x8xbf16>, vector<8x16xbf16>, vector<8x16xf32> -> vector<8x16xf32>
    %cst_38 = arith.constant 1.250000e-01 : f32
    %78 = vector.broadcast %cst_38 : f32 to vector<8x16xf32>
    %79 = arith.mulf %77, %78 : vector<8x16xf32>
    %c0_39 = arith.constant 0 : index
    %c0_40 = arith.constant 0 : index
    %c32 = arith.constant 32 : index
    %80 = vector.load %arg9[%c0_39, %c0_40, %c32] : memref<1x8x64xf32, #tpu.memory_space<vmem>>, vector<1x8x16xf32>
    %81 = vector.shape_cast %80 : vector<1x8x16xf32> to vector<8x16xf32>
    %82 = vector.shape_cast %79 : vector<8x16xf32> to vector<1x8x16xf32>
    tpu.vector_store %arg9[%c0_39, %c0_40, %c32], %82 {strides = array<i32>} : memref<1x8x64xf32, #tpu.memory_space<vmem>>, vector<1x8x16xf32>,
    %83 = vector.extract_strided_slice %8 {offsets = [0, 48], sizes = [8, 16], strides = [1, 1]} : vector<8x64xbf16> to vector<8x16xbf16>
    %84 = vector.extract_strided_slice %9 {offsets = [0, 48], sizes = [8, 16], strides = [1, 1]} : vector<8x64xbf16> to vector<8x16xbf16>
    %85 = vector.extract_strided_slice %10 {offsets = [0, 48], sizes = [8, 16], strides = [1, 1]} : vector<8x64xbf16> to vector<8x16xbf16>
    %cst_41 = arith.constant dense<0.000000e+00> : vector<8x8xf32>
    %86 = tpu.matmul %83, %84, %cst_41 {dimension_numbers = #tpu.dot_dimension_numbers<[1], [1], [0], [0], [0, 0, 1, 0], [], []>} : vector<8x16xbf16>, vector<8x16xbf16>, vector<8x8xf32> -> vector<8x8xf32>
    %cst_42 = arith.constant dense<0xFF800000> : vector<8xf32>
    %87 = vector.multi_reduction <maximumf>, %86, %cst_42 [1] : vector<8x8xf32> to vector<8xf32>
    %88 = vector.shape_cast %87 : vector<8xf32> to vector<8x1xf32>
    %89 = vector.broadcast %88 : vector<8x1xf32> to vector<8x8xf32>
    %90 = arith.subf %86, %89 : vector<8x8xf32>
    %91 = math.exp %90 : vector<8x8xf32>
    %cst_43 = arith.constant dense<0.000000e+00> : vector<8xf32>
    %92 = vector.multi_reduction <add>, %91, %cst_43 [1] : vector<8x8xf32> to vector<8xf32>
    %93 = vector.shape_cast %92 : vector<8xf32> to vector<8x1xf32>
    %94 = tpu.reciprocal %93 {approx = true} : vector<8x1xf32> -> vector<8x1xf32>
    %95 = vector.broadcast %94 : vector<8x1xf32> to vector<8x8xf32>
    %96 = arith.mulf %91, %95 : vector<8x8xf32>
    %c0_44 = arith.constant 0 : index
    %c3 = arith.constant 3 : index
    %c0_45 = arith.constant 0 : index
    %c0_46 = arith.constant 0 : index
    %97 = vector.load %arg8[%c0_44, %c3, %c0_45, %c0_46] : memref<1x4x8x8xf32, #tpu.memory_space<vmem>>, vector<1x1x8x8xf32>
    %98 = vector.shape_cast %97 : vector<1x1x8x8xf32> to vector<8x8xf32>
    %99 = vector.shape_cast %96 : vector<8x8xf32> to vector<1x1x8x8xf32>
    tpu.vector_store %arg8[%c0_44, %c3, %c0_45, %c0_46], %99 {strides = array<i32>} : memref<1x4x8x8xf32, #tpu.memory_space<vmem>>, vector<1x1x8x8xf32>,
    %100 = arith.truncf %96 : vector<8x8xf32> to vector<8x8xbf16>
    %cst_47 = arith.constant dense<0.000000e+00> : vector<8x16xf32>
    %101 = tpu.matmul %100, %85, %cst_47 {dimension_numbers = #tpu.dot_dimension_numbers<[1], [0], [0], [1], [0, 0, 1, 1], [], []>} : vector<8x8xbf16>, vector<8x16xbf16>, vector<8x16xf32> -> vector<8x16xf32>
    %cst_48 = arith.constant 1.250000e-01 : f32
    %102 = vector.broadcast %cst_48 : f32 to vector<8x16xf32>
    %103 = arith.mulf %101, %102 : vector<8x16xf32>
    %c0_49 = arith.constant 0 : index
    %c0_50 = arith.constant 0 : index
    %c48 = arith.constant 48 : index
    %104 = vector.load %arg9[%c0_49, %c0_50, %c48] : memref<1x8x64xf32, #tpu.memory_space<vmem>>, vector<1x8x16xf32>
    %105 = vector.shape_cast %104 : vector<1x8x16xf32> to vector<8x16xf32>
    %106 = vector.shape_cast %103 : vector<8x16xf32> to vector<1x8x16xf32>
    tpu.vector_store %arg9[%c0_49, %c0_50, %c48], %106 {strides = array<i32>} : memref<1x8x64xf32, #tpu.memory_space<vmem>>, vector<1x8x16xf32>,
    return
  }
  func.func @transform_0(%arg0: i32, %arg1: i32) -> (i32, i32, i32) {
    %c0_i32 = arith.constant 0 : i32
    %c0_i32_0 = arith.constant 0 : i32
    %c0_i32_1 = arith.constant 0 : i32
    return %arg0, %c0_i32, %c0_i32_0 : i32, i32, i32
  }
  func.func @transform_1(%arg0: i32, %arg1: i32) -> (i32, i32, i32) {
    %c0_i32 = arith.constant 0 : i32
    %c0_i32_0 = arith.constant 0 : i32
    return %arg0, %arg1, %c0_i32 : i32, i32, i32
  }
  func.func @transform_2(%arg0: i32, %arg1: i32) -> (i32, i32, i32) {
    %c0_i32 = arith.constant 0 : i32
    %c0_i32_0 = arith.constant 0 : i32
    %c0_i32_1 = arith.constant 0 : i32
    return %arg0, %c0_i32, %c0_i32_0 : i32, i32, i32
  }
  func.func @transform_3(%arg0: i32, %arg1: i32) -> (i32, i32) {
    %c0_i32 = arith.constant 0 : i32
    %c0_i32_0 = arith.constant 0 : i32
    %c0_i32_1 = arith.constant 0 : i32
    return %c0_i32, %c0_i32_0 : i32, i32
  }
  func.func @transform_4(%arg0: i32, %arg1: i32) -> (i32, i32) {
    %c0_i32 = arith.constant 0 : i32
    %c0_i32_0 = arith.constant 0 : i32
    %c0_i32_1 = arith.constant 0 : i32
    return %c0_i32, %c0_i32_0 : i32, i32
  }
  func.func @transform_5(%arg0: i32, %arg1: i32) -> (i32, i32) {
    %c0_i32 = arith.constant 0 : i32
    %c0_i32_0 = arith.constant 0 : i32
    %c0_i32_1 = arith.constant 0 : i32
    return %c0_i32, %c0_i32_0 : i32, i32
  }
  func.func @transform_6(%arg0: i32, %arg1: i32) -> (i32, i32, i32, i32) {
    %c0_i32 = arith.constant 0 : i32
    %c0_i32_0 = arith.constant 0 : i32
    %c0_i32_1 = arith.constant 0 : i32
    return %arg0, %c0_i32, %arg1, %c0_i32_0 : i32, i32, i32, i32
  }
  func.func @transform_7(%arg0: i32, %arg1: i32) -> (i32, i32, i32) {
    %c0_i32 = arith.constant 0 : i32
    %c0_i32_0 = arith.constant 0 : i32
    return %arg0, %arg1, %c0_i32 : i32, i32, i32
  }
}

</mosaic_0001>

<llo_original>
// kernel: tpu_custom_call.1
$region0: #{tpu_custom_call.1}
  #allocation0 [shape = 'u32[]', space=smem, size = 0x4, offset = 0x4, fixed_abs, tag = 'smem constant byte address 0x4 - core index']
  #allocation1 [shape = 'u32[144,128]{1,0:T(1,128)}', space=vmem, size = 0x12000, scoped, tag = 'internal scratch']
  #allocation2 [shape = 'bf16[8,64]{1,0:T(8,128)(2,1)}', space=vmem, size = 0x800, scoped, tag = 'scratch operand']
  #allocation3 [shape = 'bf16[8,64]{1,0:T(8,128)(2,1)}', space=vmem, size = 0x800, scoped, tag = 'scratch operand']
  %s0 = inlined_call_operand.hbm [shape: f32[2,8,32], index: 0, kind: input, shape index: {}]
  %s1 = inlined_call_operand.hbm [shape: f32[2,8,32], index: 1, kind: input, shape index: {}]
  %s2 = inlined_call_operand.hbm [shape: f32[2,8,32], index: 2, kind: input, shape index: {}]
  %s3 = inlined_call_operand.hbm [shape: bf16[32,64], index: 3, kind: input, shape index: {}]
  %s4 = inlined_call_operand.hbm [shape: bf16[32,64], index: 4, kind: input, shape index: {}]
  %s5 = inlined_call_operand.hbm [shape: bf16[32,64], index: 5, kind: input, shape index: {}]
  %s6 = inlined_call_operand.hbm [shape: f32[2,4,8,8], index: 6, kind: output, shape index: {0}]
  %s7 = inlined_call_operand.hbm [shape: f32[2,8,64], index: 7, kind: output, shape index: {1}]
  %8 = xla_tuple %s6, %s7
  %s9 = sld [smem:[#allocation0]]
  $region93: #{tpu_custom_call.1} parent=0
    _
  %s11 = ssub.s32 1, %s9
  %s12 = scalar_select 0, %s11, %s9
  $region1: #{tpu_custom_call.1} parent=0
    #allocation4 [shape = 'u8[8192]{0}', space=vmem, size = 0x2000, scoped, tag = 'input window, operand 0']
    #allocation5 [shape = 's32[2]{0}', space=sflag, size = 0x8, scoped, tag = 'scoped memory for tpu_custom_call.1']
    #allocation6 [shape = 's32[2]{0}', space=sflag, size = 0x8, scoped, tag = 'scoped memory for tpu_custom_call.1']
    #allocation7 [shape = 'u8[8192]{0}', space=vmem, size = 0x2000, scoped, tag = 'input window, operand 1']
    #allocation8 [shape = 's32[2]{0}', space=sflag, size = 0x8, scoped, tag = 'scoped memory for tpu_custom_call.1']
    #allocation9 [shape = 'u8[8192]{0}', space=vmem, size = 0x2000, scoped, tag = 'input window, operand 2']
    #allocation10 [shape = 'u8[8192]{0}', space=vmem, size = 0x2000, scoped, tag = 'input window, operand 3, single buffered']
    #allocation11 [shape = 's32[1]{0}', space=sflag, size = 0x4, scoped, tag = 'scoped memory for tpu_custom_call.1']
    #allocation12 [shape = 'u8[8192]{0}', space=vmem, size = 0x2000, scoped, tag = 'input window, operand 4, single buffered']
    #allocation13 [shape = 'u8[8192]{0}', space=vmem, size = 0x2000, scoped, tag = 'input window, operand 5, single buffered']
    #allocation14 [shape = 's32[1]{0}', space=sflag, size = 0x4, scoped, tag = 'scoped memory for tpu_custom_call.1']
    #allocation15 [shape = 'u8[32768]{0}', space=vmem, size = 0x8000, scoped, tag = 'output window, operand 0']
    #allocation16 [shape = 'u8[8192]{0}', space=vmem, size = 0x2000, scoped, tag = 'output window, operand 1']
    #allocation17 [shape = 's32[2]{0}', space=sflag, size = 0x8, scoped, tag = 'scoped memory for tpu_custom_call.1']
    %13 = vsyncpa [#allocation5], 0
    %s14 = scalar_lea.sflag [#allocation5], 1
    %15 = vsyncpa %s14, 0
    %16 = vsyncpa [#allocation8], 0
    %s17 = scalar_lea.sflag [#allocation8], 1
    %18 = vsyncpa %s17, 0
    %19 = vsyncpa [#allocation11], 0
    %20 = vsyncpa [#allocation14], 0
    %21 = vsyncpa [#allocation6], 0
    %s22 = scalar_lea.sflag [#allocation6], 1
    %23 = vsyncpa %s22, 0
    %24 = vsyncpa [#allocation17], 0
    %s25 = scalar_lea.sflag [#allocation17], 1
    %26 = vsyncpa %s25, 0
    loop: start=0, step=1, limit=4
    $region2: #{tpu_custom_call.1} parent=1 // loop_pre_header
      _
    $region3: #{tpu_custom_call.1} parent=1 // loop_header
      %s28 = sphi 0, %s32
      %p29 = scmp.ge.s32.totalorder %s28, 4
      %s35 = sphi 0, %s47
      %s36 = sphi 0, %s43
      %s37 = sphi 0, %s35
      %s38 = sphi 0, %s36
      %s39 = sphi 0, %s37
      %s40 = sphi 0, %s38
      %s50 = sphi 0, %s52
      %s53 = sphi 0, %s50
      %s54 = sphi 0, %s53
      %s70 = sphi 0, %s54
      %s78 = sphi 0, %s80
      %s81 = sphi 0, %s78
      %s82 = sphi 0, %s81
      %s98 = sphi 0, %s82
      %s104 = sphi 0, %s106
      %s107 = sphi 0, %s104
      %s108 = sphi 0, %s107
      %s124 = sphi 0, %s108
      %s128 = sphi 0, %s128
      %s130 = sphi 0, %s128
      %s131 = sphi 0, %s130
      %s145 = sphi 0, %s131
      %s149 = sphi 0, %s149
      %s151 = sphi 0, %s149
      %s152 = sphi 0, %s151
      %s166 = sphi 0, %s152
      %s170 = sphi 0, %s170
      %s172 = sphi 0, %s170
      %s173 = sphi 0, %s172
      %s187 = sphi 0, %s173
      %s195 = sphi 0, %s197
      %s198 = sphi 0, %s195
      %s199 = sphi 0, %s198
      %s215 = sphi 0, %s199
      %s223 = sphi 0, %s225
      %s226 = sphi 0, %s223
      %s227 = sphi 0, %s226
      %s243 = sphi 0, %s227
    $region4: #{tpu_custom_call.1} parent=1 // loop_header_branch
      %31 = sbr.rel (%p29) target = $region8
    $region5: #{tpu_custom_call.1} parent=1 // loop_body
      %s33 = ssub.s32 %s28, 1
      %s34 = ssub.s32 %s28, 2
      %s41 = sadd.s32 1, %s36
      %p42 = scmp.ge.s32.totalorder %s41, 1
      %s43 = scalar_select %p42, 0, %s41
      %s44 = sadd.s32 1, %s35
      %s45 = scalar_select %p42, %s44, %s35
      %p46 = scmp.ge.s32.totalorder %s45, 2
      %s47 = scalar_select %p46, 0, %s45
      %s48 = ssub.s32 %s35, %s47
      %p49 = scmp.eq.s32.totalorder %s48, 0
      %s51 = sadd.s32 %s50, 1
      %s52 = scalar_select %p49, %s50, %s51
      %p55 = pneg %p49
      %p56 = scmp.eq.s32.totalorder %s28, 1
      %p57 = por %p55, %p56
      %p58 = scmp.ne.s32.totalorder %s50, %s53
      %p59 = scmp.eq.s32.totalorder %s28, 0
      %p60 = por %p58, %p59
      %p61 = scmp.ne.s32.totalorder %s50, %s53
      %p62 = scmp.eq.s32.totalorder %s33, 1
      %p63 = por %p61, %p62
      %p64 = scmp.ne.s32.totalorder %s53, %s54
      %p65 = scmp.eq.s32.totalorder %s33, 0
      %p66 = por %p64, %p65
      %p67 = scmp.ne.s32.totalorder %s53, %s54
      %p68 = scmp.eq.s32.totalorder %s34, 1
      %p69 = por %p67, %p68
      %p71 = scmp.ne.s32.totalorder %s54, %s70
      %p72 = scmp.eq.s32.totalorder %s34, 0
      %p73 = por %p71, %p72
      %s74 = ssub.s32 %s35, %s47
      %s75 = ssub.s32 %s36, %s43
      %s76 = sor.u32 %s74, %s75
      %p77 = scmp.eq.s32.totalorder %s76, 0
      %s79 = sadd.s32 %s78, 1
      %s80 = scalar_select %p77, %s78, %s79
      %p83 = pneg %p77
      %p84 = scmp.eq.s32.totalorder %s28, 1
      %p85 = por %p83, %p84
      %p86 = scmp.ne.s32.totalorder %s78, %s81
      %p87 = scmp.eq.s32.totalorder %s28, 0
      %p88 = por %p86, %p87
      %p89 = scmp.ne.s32.totalorder %s78, %s81
      %p90 = scmp.eq.s32.totalorder %s33, 1
      %p91 = por %p89, %p90
      %p92 = scmp.ne.s32.totalorder %s81, %s82
      %p93 = scmp.eq.s32.totalorder %s33, 0
      %p94 = por %p92, %p93
      %p95 = scmp.ne.s32.totalorder %s81, %s82
      %p96 = scmp.eq.s32.totalorder %s34, 1
      %p97 = por %p95, %p96
      %p99 = scmp.ne.s32.totalorder %s82, %s98
      %p100 = scmp.eq.s32.totalorder %s34, 0
      %p101 = por %p99, %p100
      %s102 = ssub.s32 %s35, %s47
      %p103 = scmp.eq.s32.totalorder %s102, 0
      %s105 = sadd.s32 %s104, 1
      %s106 = scalar_select %p103, %s104, %s105
      %p109 = pneg %p103
      %p110 = scmp.eq.s32.totalorder %s28, 1
      %p111 = por %p109, %p110
      %p112 = scmp.ne.s32.totalorder %s104, %s107
      %p113 = scmp.eq.s32.totalorder %s28, 0
      %p114 = por %p112, %p113
      %p115 = scmp.ne.s32.totalorder %s104, %s107
      %p116 = scmp.eq.s32.totalorder %s33, 1
      %p117 = por %p115, %p116
      %p118 = scmp.ne.s32.totalorder %s107, %s108
      %p119 = scmp.eq.s32.totalorder %s33, 0
      %p120 = por %p118, %p119
      %p121 = scmp.ne.s32.totalorder %s107, %s108
      %p122 = scmp.eq.s32.totalorder %s34, 1
      %p123 = por %p121, %p122
      %p125 = scmp.ne.s32.totalorder %s108, %s124
      %p126 = scmp.eq.s32.totalorder %s34, 0
      %p127 = por %p125, %p126
      %s129 = sadd.s32 %s128, 1
      %p132 = scmp.eq.s32.totalorder %s28, 1
      %p133 = scmp.ne.s32.totalorder %s128, %s130
      %p134 = scmp.eq.s32.totalorder %s28, 0
      %p135 = por %p133, %p134
      %p136 = scmp.ne.s32.totalorder %s128, %s130
      %p137 = scmp.eq.s32.totalorder %s33, 1
      %p138 = por %p136, %p137
      %p139 = scmp.ne.s32.totalorder %s130, %s131
      %p140 = scmp.eq.s32.totalorder %s33, 0
      %p141 = por %p139, %p140
      %p142 = scmp.ne.s32.totalorder %s130, %s131
      %p143 = scmp.eq.s32.totalorder %s34, 1
      %p144 = por %p142, %p143
      %p146 = scmp.ne.s32.totalorder %s131, %s145
      %p147 = scmp.eq.s32.totalorder %s34, 0
      %p148 = por %p146, %p147
      %s150 = sadd.s32 %s149, 1
      %p153 = scmp.eq.s32.totalorder %s28, 1
      %p154 = scmp.ne.s32.totalorder %s149, %s151
      %p155 = scmp.eq.s32.totalorder %s28, 0
      %p156 = por %p154, %p155
      %p157 = scmp.ne.s32.totalorder %s149, %s151
      %p158 = scmp.eq.s32.totalorder %s33, 1
      %p159 = por %p157, %p158
      %p160 = scmp.ne.s32.totalorder %s151, %s152
      %p161 = scmp.eq.s32.totalorder %s33, 0
      %p162 = por %p160, %p161
      %p163 = scmp.ne.s32.totalorder %s151, %s152
      %p164 = scmp.eq.s32.totalorder %s34, 1
      %p165 = por %p163, %p164
      %p167 = scmp.ne.s32.totalorder %s152, %s166
      %p168 = scmp.eq.s32.totalorder %s34, 0
      %p169 = por %p167, %p168
      %s171 = sadd.s32 %s170, 1
      %p174 = scmp.eq.s32.totalorder %s28, 1
      %p175 = scmp.ne.s32.totalorder %s170, %s172
      %p176 = scmp.eq.s32.totalorder %s28, 0
      %p177 = por %p175, %p176
      %p178 = scmp.ne.s32.totalorder %s170, %s172
      %p179 = scmp.eq.s32.totalorder %s33, 1
      %p180 = por %p178, %p179
      %p181 = scmp.ne.s32.totalorder %s172, %s173
      %p182 = scmp.eq.s32.totalorder %s33, 0
      %p183 = por %p181, %p182
      %p184 = scmp.ne.s32.totalorder %s172, %s173
      %p185 = scmp.eq.s32.totalorder %s34, 1
      %p186 = por %p184, %p185
      %p188 = scmp.ne.s32.totalorder %s173, %s187
      %p189 = scmp.eq.s32.totalorder %s34, 0
      %p190 = por %p188, %p189
      %s191 = ssub.s32 %s35, %s47
      %s192 = ssub.s32 %s36, %s43
      %s193 = sor.u32 %s191, %s192
      %p194 = scmp.eq.s32.totalorder %s193, 0
      %s196 = sadd.s32 %s195, 1
      %s197 = scalar_select %p194, %s195, %s196
      %p200 = pneg %p194
      %p201 = scmp.eq.s32.totalorder %s28, 1
      %p202 = por %p200, %p201
      %p203 = scmp.ne.s32.totalorder %s195, %s198
      %p204 = scmp.eq.s32.totalorder %s28, 0
      %p205 = por %p203, %p204
      %p206 = scmp.ne.s32.totalorder %s195, %s198
      %p207 = scmp.eq.s32.totalorder %s33, 1
      %p208 = por %p206, %p207
      %p209 = scmp.ne.s32.totalorder %s198, %s199
      %p210 = scmp.eq.s32.totalorder %s33, 0
      %p211 = por %p209, %p210
      %p212 = scmp.ne.s32.totalorder %s198, %s199
      %p213 = scmp.eq.s32.totalorder %s34, 1
      %p214 = por %p212, %p213
      %p216 = scmp.ne.s32.totalorder %s199, %s215
      %p217 = scmp.eq.s32.totalorder %s34, 0
      %p218 = por %p216, %p217
      %s219 = ssub.s32 %s35, %s47
      %s220 = ssub.s32 %s36, %s43
      %s221 = sor.u32 %s219, %s220
      %p222 = scmp.eq.s32.totalorder %s221, 0
      %s224 = sadd.s32 %s223, 1
      %s225 = scalar_select %p222, %s223, %s224
      %p228 = pneg %p222
      %p229 = scmp.eq.s32.totalorder %s28, 1
      %p230 = por %p228, %p229
      %p231 = scmp.ne.s32.totalorder %s223, %s226
      %p232 = scmp.eq.s32.totalorder %s28, 0
      %p233 = por %p231, %p232
      %p234 = scmp.ne.s32.totalorder %s223, %s226
      %p235 = scmp.eq.s32.totalorder %s33, 1
      %p236 = por %p234, %p235
      %p237 = scmp.ne.s32.totalorder %s226, %s227
      %p238 = scmp.eq.s32.totalorder %s33, 0
      %p239 = por %p237, %p238
      %p240 = scmp.ne.s32.totalorder %s226, %s227
      %p241 = scmp.eq.s32.totalorder %s34, 1
      %p242 = por %p240, %p241
      %p244 = scmp.ne.s32.totalorder %s227, %s243
      %p245 = scmp.eq.s32.totalorder %s34, 0
      %p246 = por %p244, %p245
      %p247 = scmp.le.s32.totalorder 1, %s28
      %p248 = scmp.lt.s32.totalorder %s28, 3
      %p249 = pnand %p247, %p248
      %p250 = pneg %p249
      // Predicated region
      $region9: #{tpu_custom_call.1} parent=5 // pred_check
        _
      $region10: #{tpu_custom_call.1} parent=5 // pred_check_branch
        %252 = sbr.rel (%p249) target = $region12
      $region11: #{tpu_custom_call.1} parent=5 // pred_region
        %s253 = ssub.s32 %s28, 1
        // Predicated region
        $region13: #{tpu_custom_call.1} parent=11 // pred_check
          %p254 = pneg %p141
        $region14: #{tpu_custom_call.1} parent=11 // pred_check_branch
          %256 = sbr.rel (%p254) target = $region16
        $region15: #{tpu_custom_call.1} parent=11 // pred_region
          %s258 = ssub.s32 256, 256
          %259 = vsyncadd [#allocation11], %s258
          %s260 = sshll.u32 [#allocation10], 4
          %s261 = int_to_ptr.vmem [resolvable:$true] %s260
          %266 = dma.hbm_to_vmem [thread:$0]  %s3, 256, %s261, [#allocation11], 64, 64, 4
        $region16: #{tpu_custom_call.1} parent=11 // pred_fallthru
          _
        // Predicated region
        $region17: #{tpu_custom_call.1} parent=11 // pred_check
          %p267 = pneg %p162
        $region18: #{tpu_custom_call.1} parent=11 // pred_check_branch
          %269 = sbr.rel (%p267) target = $region20
        $region19: #{tpu_custom_call.1} parent=11 // pred_region
          %s271 = ssub.s32 256, 256
          %272 = vsyncadd [#allocation11], %s271
          %s273 = sshll.u32 [#allocation12], 4
          %s274 = int_to_ptr.vmem [resolvable:$true] %s273
          %279 = dma.hbm_to_vmem [thread:$0]  %s4, 256, %s274, [#allocation11], 64, 64, 4
        $region20: #{tpu_custom_call.1} parent=11 // pred_fallthru
          _
        // Predicated region
        $region21: #{tpu_custom_call.1} parent=11 // pred_check
          %p280 = pneg %p183
        $region22: #{tpu_custom_call.1} parent=11 // pred_check_branch
          %282 = sbr.rel (%p280) target = $region24
        $region23: #{tpu_custom_call.1} parent=11 // pred_region
          %s284 = ssub.s32 256, 256
          %285 = vsyncadd [#allocation14], %s284
          %s286 = sshll.u32 [#allocation13], 4
          %s287 = int_to_ptr.vmem [resolvable:$true] %s286
          %292 = dma.hbm_to_vmem [thread:$0]  %s5, 256, %s287, [#allocation14], 64, 64, 4
        $region24: #{tpu_custom_call.1} parent=11 // pred_fallthru
          _
      $region12: #{tpu_custom_call.1} parent=5 // pred_fallthru
        _
      %p293 = scmp.lt.s32.totalorder %s28, 2
      // Predicated region
      $region25: #{tpu_custom_call.1} parent=5 // pred_check
        %p294 = pneg %p293
      $region26: #{tpu_custom_call.1} parent=5 // pred_check_branch
        %296 = sbr.rel (%p294) target = $region28
      $region27: #{tpu_custom_call.1} parent=5 // pred_region
        // Predicated region
        $region29: #{tpu_custom_call.1} parent=27 // pred_check
          %p297 = pneg %p60
        $region30: #{tpu_custom_call.1} parent=27 // pred_check_branch
          %299 = sbr.rel (%p297) target = $region32
        $region31: #{tpu_custom_call.1} parent=27 // pred_region
          %s300 = sand.u32 %s50, 1
          %s301 = scalar_lea.sflag [#allocation5], %s300
          %s302 = sand.u32 %s50, 1
          %s303 = smul.addr %s302, 8
          %s304 = scalar_lea.vmem [#allocation4], %s303
          %s306 = ssub.s32 128, 128
          %307 = vsyncadd %s301, %s306
          %s308 = smul.addr %s35, 128
          %s309 = scalar_lea.hbm %s0, %s308
          %s311 = sshll.u32 %s304, 4
          %s312 = int_to_ptr.vmem [resolvable:$true] %s311
          %314 = dma.hbm_to_vmem [thread:$0]  %s309, 128, %s312, %s301
        $region32: #{tpu_custom_call.1} parent=27 // pred_fallthru
          _
        // Predicated region
        $region33: #{tpu_custom_call.1} parent=27 // pred_check
          %p315 = pneg %p88
        $region34: #{tpu_custom_call.1} parent=27 // pred_check_branch
          %317 = sbr.rel (%p315) target = $region36
        $region35: #{tpu_custom_call.1} parent=27 // pred_region
          %s318 = sand.u32 %s28, 1
          %s319 = scalar_lea.sflag [#allocation8], %s318
          %s320 = sand.u32 %s78, 1
          %s321 = smul.addr %s320, 8
          %s322 = scalar_lea.vmem [#allocation7], %s321
          %s324 = ssub.s32 128, 128
          %325 = vsyncadd %s319, %s324
          %s326 = sadd.s32 %s36, %s35
          %s327 = smul.addr %s326, 128
          %s328 = scalar_lea.hbm %s1, %s327
          %s330 = sshll.u32 %s322, 4
          %s331 = int_to_ptr.vmem [resolvable:$true] %s330
          %333 = dma.hbm_to_vmem [thread:$0]  %s328, 128, %s331, %s319
        $region36: #{tpu_custom_call.1} parent=27 // pred_fallthru
          _
        // Predicated region
        $region37: #{tpu_custom_call.1} parent=27 // pred_check
          %p334 = pneg %p114
        $region38: #{tpu_custom_call.1} parent=27 // pred_check_branch
          %336 = sbr.rel (%p334) target = $region40
        $region39: #{tpu_custom_call.1} parent=27 // pred_region
          %s337 = sand.u32 %s28, 1
          %s338 = scalar_lea.sflag [#allocation8], %s337
          %s339 = sand.u32 %s104, 1
          %s340 = smul.addr %s339, 8
          %s341 = scalar_lea.vmem [#allocation9], %s340
          %s343 = ssub.s32 128, 128
          %344 = vsyncadd %s338, %s343
          %s345 = smul.addr %s35, 128
          %s346 = scalar_lea.hbm %s2, %s345
          %s348 = sshll.u32 %s341, 4
          %s349 = int_to_ptr.vmem [resolvable:$true] %s348
          %351 = dma.hbm_to_vmem [thread:$0]  %s346, 128, %s349, %s338
        $region40: #{tpu_custom_call.1} parent=27 // pred_fallthru
          _
      $region28: #{tpu_custom_call.1} parent=5 // pred_fallthru
        _
      %p352 = scmp.le.s32.totalorder 1, %s28
      %p353 = scmp.lt.s32.totalorder %s28, 3
      %p354 = pnand %p352, %p353
      %p355 = pneg %p354
      // Predicated region
      $region41: #{tpu_custom_call.1} parent=5 // pred_check
        _
      $region42: #{tpu_custom_call.1} parent=5 // pred_check_branch
        %357 = sbr.rel (%p354) target = $region44
      $region43: #{tpu_custom_call.1} parent=5 // pred_region
        %s358 = ssub.s32 %s28, 1
        %s359 = sand.u32 %s53, 1
        %s360 = scalar_lea.sflag [#allocation5], %s359
        %s361 = sand.u32 %s53, 1
        %s362 = smul.addr %s361, 8
        %s363 = scalar_lea.vmem [#allocation4], %s362
        // Predicated region
        $region45: #{tpu_custom_call.1} parent=43 // pred_check
          %p364 = pneg %p66
        $region46: #{tpu_custom_call.1} parent=43 // pred_check_branch
          %366 = sbr.rel (%p364) target = $region48
        $region47: #{tpu_custom_call.1} parent=43 // pred_region
          %367 = dma.done %s360, 128
        $region48: #{tpu_custom_call.1} parent=43 // pred_fallthru
          _
        %s368 = sand.u32 %s33, 1
        %s369 = scalar_lea.sflag [#allocation8], %s368
        %s370 = sand.u32 %s81, 1
        %s371 = smul.addr %s370, 8
        %s372 = scalar_lea.vmem [#allocation7], %s371
        // Predicated region
        $region49: #{tpu_custom_call.1} parent=43 // pred_check
          %p373 = pneg %p94
        $region50: #{tpu_custom_call.1} parent=43 // pred_check_branch
          %375 = sbr.rel (%p373) target = $region52
        $region51: #{tpu_custom_call.1} parent=43 // pred_region
          %376 = dma.done %s369, 128
        $region52: #{tpu_custom_call.1} parent=43 // pred_fallthru
          _
        %s377 = sand.u32 %s33, 1
        %s378 = scalar_lea.sflag [#allocation8], %s377
        %s379 = sand.u32 %s107, 1
        %s380 = smul.addr %s379, 8
        %s381 = scalar_lea.vmem [#allocation9], %s380
        // Predicated region
        $region53: #{tpu_custom_call.1} parent=43 // pred_check
          %p382 = pneg %p120
        $region54: #{tpu_custom_call.1} parent=43 // pred_check_branch
          %384 = sbr.rel (%p382) target = $region56
        $region55: #{tpu_custom_call.1} parent=43 // pred_region
          %385 = dma.done %s378, 128
        $region56: #{tpu_custom_call.1} parent=43 // pred_fallthru
          _
        // Predicated region
        $region57: #{tpu_custom_call.1} parent=43 // pred_check
          %p386 = pneg %p141
        $region58: #{tpu_custom_call.1} parent=43 // pred_check_branch
          %388 = sbr.rel (%p386) target = $region60
        $region59: #{tpu_custom_call.1} parent=43 // pred_region
          %389 = dma.done [#allocation11], 256
        $region60: #{tpu_custom_call.1} parent=43 // pred_fallthru
          _
        // Predicated region
        $region61: #{tpu_custom_call.1} parent=43 // pred_check
          %p390 = pneg %p162
        $region62: #{tpu_custom_call.1} parent=43 // pred_check_branch
          %392 = sbr.rel (%p390) target = $region64
        $region63: #{tpu_custom_call.1} parent=43 // pred_region
          %393 = dma.done [#allocation11], 256
        $region64: #{tpu_custom_call.1} parent=43 // pred_fallthru
          _
        // Predicated region
        $region65: #{tpu_custom_call.1} parent=43 // pred_check
          %p394 = pneg %p183
        $region66: #{tpu_custom_call.1} parent=43 // pred_check_branch
          %396 = sbr.rel (%p394) target = $region68
        $region67: #{tpu_custom_call.1} parent=43 // pred_region
          %397 = dma.done [#allocation14], 256
        $region68: #{tpu_custom_call.1} parent=43 // pred_fallthru
          _
        %s398 = sand.u32 %s53, 1
        %s399 = scalar_lea.sflag [#allocation5], %s398
        %s400 = sand.u32 %s53, 1
        %s401 = smul.addr %s400, 8
        %s402 = scalar_lea.vmem [#allocation4], %s401
        %p403 = pneg %p66
        %p404 = pneg %p63
        %s405 = sand.u32 %s33, 1
        %s406 = scalar_lea.sflag [#allocation8], %s405
        %s407 = sand.u32 %s81, 1
        %s408 = smul.addr %s407, 8
        %s409 = scalar_lea.vmem [#allocation7], %s408
        %p410 = pneg %p94
        %p411 = pneg %p91
        %s412 = sand.u32 %s33, 1
        %s413 = scalar_lea.sflag [#allocation8], %s412
        %s414 = sand.u32 %s107, 1
        %s415 = smul.addr %s414, 8
        %s416 = scalar_lea.vmem [#allocation9], %s415
        %p417 = pneg %p120
        %p418 = pneg %p117
        %p419 = pneg %p141
        %p420 = pneg %p138
        %p421 = pneg %p162
        %p422 = pneg %p159
        %p423 = pneg %p183
        %p424 = pneg %p180
        %p425 = pneg %p211
        %p426 = pneg %p208
        %s427 = sand.u32 %s198, 1
        %s428 = scalar_lea.sflag [#allocation6], %s427
        %s429 = sand.u32 %s198, 1
        %s430 = smul.addr %s429, 32
        %s431 = scalar_lea.vmem [#allocation15], %s430
        %p432 = pneg %p239
        %p433 = pneg %p236
        %s434 = sand.u32 %s226, 1
        %s435 = scalar_lea.sflag [#allocation17], %s434
        %s436 = sand.u32 %s226, 1
        %s437 = smul.addr %s436, 8
        %s438 = scalar_lea.vmem [#allocation16], %s437
        %p440 = scmp.eq.s32.totalorder %s38, 0
        // Predicated region
        $region69: #{tpu_custom_call.1} parent=43 // pred_check
          %p441 = pneg %p440
        $region70: #{tpu_custom_call.1} parent=43 // pred_check_branch
          %443 = sbr.rel (%p441) target = $region72
        $region71: #{tpu_custom_call.1} parent=43 // pred_region
          %v444 = vld [vmem:[%s363] sm:$0xff]
          %v445 = vpack.c.bf16 %v444, %v444
          %v446 = vld [vmem:[%s381] sm:$0xff]
          %v447 = vpack.c.bf16 %v446, %v446
          %v448 = vld [vmem:[#allocation10] sm:$0xf]
          %v449 = vld [vmem:[#allocation10 + $0x4] sm:$0xf]
          %v450 = vld [vmem:[#allocation10 + $0x8] sm:$0xf]
          %v451 = vld [vmem:[#allocation10 + $0xc] sm:$0xf]
          %v456 = vunpack.c.l.b16 %v448
          %v457 = vunpack.c.l.b16 %v449
          %v458 = vunpack.c.l.b16 %v450
          %v459 = vunpack.c.l.b16 %v451
          %v460 = vpack.c.b16 %v457, %v456
          %v461 = vpack.c.b16 %v459, %v458
          %vm464 = vcmask 261120
          %v466 = vsel %vm464, %v445, 0
          %468 = vmatprep.subr.bf16.mxu0 0
          %469 = vmatpush1.bf16.msra.mxu0 0
          %470 = vmatprep.subr.bf16.mxu0 0
          %471 = vmatpush1.bf16.msra.mxu0 0
          %472 = vmatprep.subr.bf16.mxu0 0
          %473 = vmatpush1.bf16.msra.mxu0 0
          %474 = vmatprep.subr.bf16.mxu0 0
          %475 = vmatpush1.bf16.msra.mxu0 0
          %476 = vmatprep.subr.bf16.mxu0 0
          %477 = vmatpush1.bf16.msra.mxu0 0
          %478 = vmatprep.subr.bf16.mxu0 0
          %479 = vmatpush1.bf16.msra.mxu0 0
          %480 = vmatprep.subr.bf16.mxu0 0
          %481 = vmatpush1.bf16.msra.mxu0 %v461
          %482 = vmatprep.subr.bf16.mxu0 0
          %483 = vmatpush1.bf16.msra.mxu0 %v460
          %484 = vmatprep.subr.bf16.mxu0 0
          %485 = vmatpush2.bf16.msra.mxu0 0
          %486 = vmatprep.subr.bf16.mxu0 0
          %487 = vmatpush2.bf16.msra.mxu0 0
          %488 = vmatprep.subr.bf16.mxu0 0
          %489 = vmatpush2.bf16.msra.mxu0 0
          %490 = vmatprep.subr.bf16.mxu0 0
          %491 = vmatpush2.bf16.msra.mxu0 0
          %492 = vmatprep.subr.bf16.mxu0 0
          %493 = vmatpush2.bf16.msra.mxu0 0
          %494 = vmatprep.subr.bf16.mxu0 0
          %495 = vmatpush2.bf16.msra.mxu0 0
          %496 = vmatprep.subr.bf16.mxu0 0
          %497 = vmatpush2.bf16.msra.mxu0 0
          %498 = vmatprep.subr.bf16.mxu0 0
          %499 = vmatpush2.bf16.msra.mxu0 0
          %500 = vmatprep.mubr.bf16.mxu0 0
          %501 = vmatmul.mubr.bf16.gmra.mxu0 %v466
          %v502 = vpop.f32.mrf.mxu0
          %v503 = vadd.f32 0.0, %v502
          %v504 = vpop.f32.mrf.mxu0
          %v505 = vpop.f32.mrf.mxu0
          %v506 = vpop.f32.mrf.mxu0
          %507 = vdwg.mxu0
          %v508 = vpack.c.bf16 %v503, %v503
          %vm509 = vcmask 519168
          %510 = vst.msk [vmem:[#allocation2] sm:$0xf] %vm509, %v508
          %v511 = vld [vmem:[#allocation13] sm:$0xf]
          %v512 = vld [vmem:[#allocation13 + $0x4] sm:$0xf]
          %v513 = vld [vmem:[#allocation13 + $0x8] sm:$0xf]
          %v514 = vld [vmem:[#allocation13 + $0xc] sm:$0xf]
          %v519 = vunpack.c.l.b16 %v511
          %v520 = vunpack.c.l.b16 %v512
          %v521 = vunpack.c.l.b16 %v513
          %v522 = vunpack.c.l.b16 %v514
          %v523 = vpack.c.b16 %v520, %v519
          %v524 = vpack.c.b16 %v522, %v521
          %v528 = vsel %vm464, %v447, 0
          %530 = vmatprep.subr.bf16.mxu0 0
          %531 = vmatpush1.bf16.msra.mxu0 0
          %532 = vmatprep.subr.bf16.mxu0 0
          %533 = vmatpush1.bf16.msra.mxu0 0
          %534 = vmatprep.subr.bf16.mxu0 0
          %535 = vmatpush1.bf16.msra.mxu0 0
          %536 = vmatprep.subr.bf16.mxu0 0
          %537 = vmatpush1.bf16.msra.mxu0 0
          %538 = vmatprep.subr.bf16.mxu0 0
          %539 = vmatpush1.bf16.msra.mxu0 0
          %540 = vmatprep.subr.bf16.mxu0 0
          %541 = vmatpush1.bf16.msra.mxu0 0
          %542 = vmatprep.subr.bf16.mxu0 0
          %543 = vmatpush1.bf16.msra.mxu0 %v524
          %544 = vmatprep.subr.bf16.mxu0 0
          %545 = vmatpush1.bf16.msra.mxu0 %v523
          %546 = vmatprep.subr.bf16.mxu0 0
          %547 = vmatpush2.bf16.msra.mxu0 0
          %548 = vmatprep.subr.bf16.mxu0 0
          %549 = vmatpush2.bf16.msra.mxu0 0
          %550 = vmatprep.subr.bf16.mxu0 0
          %551 = vmatpush2.bf16.msra.mxu0 0
          %552 = vmatprep.subr.bf16.mxu0 0
          %553 = vmatpush2.bf16.msra.mxu0 0
          %554 = vmatprep.subr.bf16.mxu0 0
          %555 = vmatpush2.bf16.msra.mxu0 0
          %556 = vmatprep.subr.bf16.mxu0 0
          %557 = vmatpush2.bf16.msra.mxu0 0
          %558 = vmatprep.subr.bf16.mxu0 0
          %559 = vmatpush2.bf16.msra.mxu0 0
          %560 = vmatprep.subr.bf16.mxu0 0
          %561 = vmatpush2.bf16.msra.mxu0 0
          %562 = vmatprep.mubr.bf16.mxu0 0
          %563 = vmatmul.mubr.bf16.gmra.mxu0 %v528
          %v564 = vpop.f32.mrf.mxu0
          %v565 = vadd.f32 0.0, %v564
          %v566 = vpop.f32.mrf.mxu0
          %v567 = vpop.f32.mrf.mxu0
          %v568 = vpop.f32.mrf.mxu0
          %569 = vdwg.mxu0
          %v570 = vpack.c.bf16 %v565, %v565
          %571 = vst.msk [vmem:[#allocation3] sm:$0xf] %vm509, %v570
        $region72: #{tpu_custom_call.1} parent=43 // pred_fallthru
          _
        %v572 = vld [vmem:[%s372] sm:$0xff]
        %v573 = vpack.c.bf16 %v572, %v572
        %v574 = vld [vmem:[#allocation12] sm:$0xf]
        %v575 = vld [vmem:[#allocation12 + $0x4] sm:$0xf]
        %v576 = vld [vmem:[#allocation12 + $0x8] sm:$0xf]
        %v577 = vld [vmem:[#allocation12 + $0xc] sm:$0xf]
        %v582 = vunpack.c.l.b16 %v574
        %v583 = vunpack.c.l.b16 %v575
        %v584 = vunpack.c.l.b16 %v576
        %v585 = vunpack.c.l.b16 %v577
        %v586 = vpack.c.b16 %v583, %v582
        %v587 = vpack.c.b16 %v585, %v584
        %vm590 = vcmask 261120
        %v592 = vsel %vm590, %v573, 0
        %594 = vmatprep.subr.bf16.mxu0 0
        %595 = vmatpush1.bf16.msra.mxu0 0
        %596 = vmatprep.subr.bf16.mxu0 0
        %597 = vmatpush1.bf16.msra.mxu0 0
        %598 = vmatprep.subr.bf16.mxu0 0
        %599 = vmatpush1.bf16.msra.mxu0 0
        %600 = vmatprep.subr.bf16.mxu0 0
        %601 = vmatpush1.bf16.msra.mxu0 0
        %602 = vmatprep.subr.bf16.mxu0 0
        %603 = vmatpush1.bf16.msra.mxu0 0
        %604 = vmatprep.subr.bf16.mxu0 0
        %605 = vmatpush1.bf16.msra.mxu0 0
        %606 = vmatprep.subr.bf16.mxu0 0
        %607 = vmatpush1.bf16.msra.mxu0 %v587
        %608 = vmatprep.subr.bf16.mxu0 0
        %609 = vmatpush1.bf16.msra.mxu0 %v586
        %610 = vmatprep.subr.bf16.mxu0 0
        %611 = vmatpush2.bf16.msra.mxu0 0
        %612 = vmatprep.subr.bf16.mxu0 0
        %613 = vmatpush2.bf16.msra.mxu0 0
        %614 = vmatprep.subr.bf16.mxu0 0
        %615 = vmatpush2.bf16.msra.mxu0 0
        %616 = vmatprep.subr.bf16.mxu0 0
        %617 = vmatpush2.bf16.msra.mxu0 0
        %618 = vmatprep.subr.bf16.mxu0 0
        %619 = vmatpush2.bf16.msra.mxu0 0
        %620 = vmatprep.subr.bf16.mxu0 0
        %621 = vmatpush2.bf16.msra.mxu0 0
        %622 = vmatprep.subr.bf16.mxu0 0
        %623 = vmatpush2.bf16.msra.mxu0 0
        %624 = vmatprep.subr.bf16.mxu0 0
        %625 = vmatpush2.bf16.msra.mxu0 0
        %626 = vmatprep.mubr.bf16.mxu0 0
        %627 = vmatmul.mubr.bf16.gmra.mxu0 %v592
        %v628 = vpop.f32.mrf.mxu0
        %v629 = vadd.f32 0.0, %v628
        %v630 = vpop.f32.mrf.mxu0
        %v631 = vpop.f32.mrf.mxu0
        %v632 = vpop.f32.mrf.mxu0
        %633 = vdwg.mxu0
        %v634 = vpack.c.bf16 %v629, %v629
        %v635 = vld [vmem:[#allocation2] sm:$0xf]
        %v636 = vld [vmem:[#allocation3] sm:$0xf]
        %vm637 = vcmask 130048
        %v639 = vsel %vm637, %v634, 0
        %v642 = vsel %vm637, %v635, 0
        %644 = vmatprep.subr.bf16.mxu0 0
        %645 = vmatpush1.bf16.xpose.msra.mxu0 0
        %646 = vmatprep.subr.bf16.mxu0 0
        %647 = vmatpush1.bf16.xpose.msra.mxu0 0
        %648 = vmatprep.subr.bf16.mxu0 0
        %649 = vmatpush1.bf16.xpose.msra.mxu0 0
        %650 = vmatprep.subr.bf16.mxu0 0
        %651 = vmatpush1.bf16.xpose.msra.mxu0 0
        %652 = vmatprep.subr.bf16.mxu0 0
        %653 = vmatpush1.bf16.xpose.msra.mxu0 0
        %654 = vmatprep.subr.bf16.mxu0 0
        %655 = vmatpush1.bf16.xpose.msra.mxu0 0
        %656 = vmatprep.subr.bf16.mxu0 0
        %657 = vmatpush1.bf16.xpose.msra.mxu0 0
        %658 = vmatprep.subr.bf16.mxu0 0
        %659 = vmatpush1.bf16.xpose.msra.mxu0 %v642
        %660 = vmatprep.subr.bf16.mxu0 0
        %661 = vmatpush2.bf16.xpose.msra.mxu0 0
        %662 = vmatprep.subr.bf16.mxu0 0
        %663 = vmatpush2.bf16.xpose.msra.mxu0 0
        %664 = vmatprep.subr.bf16.mxu0 0
        %665 = vmatpush2.bf16.xpose.msra.mxu0 0
        %666 = vmatprep.subr.bf16.mxu0 0
        %667 = vmatpush2.bf16.xpose.msra.mxu0 0
        %668 = vmatprep.subr.bf16.mxu0 0
        %669 = vmatpush2.bf16.xpose.msra.mxu0 0
        %670 = vmatprep.subr.bf16.mxu0 0
        %671 = vmatpush2.bf16.xpose.msra.mxu0 0
        %672 = vmatprep.subr.bf16.mxu0 0
        %673 = vmatpush2.bf16.xpose.msra.mxu0 0
        %674 = vmatprep.subr.bf16.mxu0 0
        %675 = vmatpush2.bf16.xpose.msra.mxu0 0
        %676 = vmatprep.mubr.bf16.mxu0 0
        %677 = vmatmul.mubr.bf16.gmra.mxu0 %v639
        %v678 = vpop.f32.mrf.mxu0
        %v679 = vadd.f32 0.0, %v678
        %v680 = vpop.f32.mrf.mxu0
        %v681 = vpop.f32.mrf.mxu0
        %v682 = vpop.f32.mrf.mxu0
        %683 = vdwg.mxu0
        %vm684 = vcmask 64512
        %v685 = vsel %vm684, %v679, -inf
        %686 = vmax.xlane.f32.xlu0 %v685
        %v687 = vpop.xlane.xlu0 %686
        %v688 = vsub.f32 %v679, %v687
        %v689 = vmul.f32 %v688, 1.442695
        %v690 = vpow.pop %v689
        %v691 = vsel %vm684, %v690, 0.0
        %692 = vadd.xlane.f32.xlu0 %v691
        %v693 = vpop.xlane.xlu0 %692
        %v694 = vrcp.pop %v693
        %v695 = vmul.f32 %v690, %v694
        %696 = vst.msk [vmem:[%s431] sm:$0xff] %vm684, %v695
        %v697 = vpack.c.bf16 %v695, %v695
        %v699 = vsel %vm684, %v697, 0
        %vm701 = vcmask 1043456
        %v703 = vsel %vm701, %v636, 0
        %705 = vmatprep.subr.bf16.mxu0 0
        %706 = vmatpush1.bf16.msra.mxu0 0
        %707 = vmatprep.subr.bf16.mxu0 0
        %708 = vmatpush1.bf16.msra.mxu0 0
        %709 = vmatprep.subr.bf16.mxu0 0
        %710 = vmatpush1.bf16.msra.mxu0 0
        %711 = vmatprep.subr.bf16.mxu0 0
        %712 = vmatpush1.bf16.msra.mxu0 0
        %713 = vmatprep.subr.bf16.mxu0 0
        %714 = vmatpush1.bf16.msra.mxu0 0
        %715 = vmatprep.subr.bf16.mxu0 0
        %716 = vmatpush1.bf16.msra.mxu0 0
        %717 = vmatprep.subr.bf16.mxu0 0
        %718 = vmatpush1.bf16.msra.mxu0 0
        %719 = vmatprep.subr.bf16.mxu0 0
        %720 = vmatpush1.bf16.msra.mxu0 %v703
        %721 = vmatprep.subr.bf16.mxu0 0
        %722 = vmatpush2.bf16.msra.mxu0 0
        %723 = vmatprep.subr.bf16.mxu0 0
        %724 = vmatpush2.bf16.msra.mxu0 0
        %725 = vmatprep.subr.bf16.mxu0 0
        %726 = vmatpush2.bf16.msra.mxu0 0
        %727 = vmatprep.subr.bf16.mxu0 0
        %728 = vmatpush2.bf16.msra.mxu0 0
        %729 = vmatprep.subr.bf16.mxu0 0
        %730 = vmatpush2.bf16.msra.mxu0 0
        %731 = vmatprep.subr.bf16.mxu0 0
        %732 = vmatpush2.bf16.msra.mxu0 0
        %733 = vmatprep.subr.bf16.mxu0 0
        %734 = vmatpush2.bf16.msra.mxu0 0
        %735 = vmatprep.subr.bf16.mxu0 0
        %736 = vmatpush2.bf16.msra.mxu0 0
        %737 = vmatprep.mubr.bf16.mxu0 0
        %738 = vmatmul.mubr.bf16.gmra.mxu0 %v699
        %v739 = vpop.f32.mrf.mxu0
        %v740 = vadd.f32 0.0, %v739
        %v741 = vpop.f32.mrf.mxu0
        %v742 = vpop.f32.mrf.mxu0
        %v743 = vpop.f32.mrf.mxu0
        %744 = vdwg.mxu0
        %v745 = vmul.f32 %v740, 0.125
        %746 = vst.msk [vmem:[%s438] sm:$0xff] %vm637, %v745
        %748 = vrot.lane.b32.xlu0 %v634, 112
        %v749 = vpop.permute.xlu0 %748
        %v751 = vunpack.c.l.b16 %v635
        %v752 = vpack.c.b16 %v751, %v751
        %753 = vrot.lane.b32.xlu0 %v752, 112
        %v754 = vpop.permute.xlu0 %753
        %v756 = vsel %vm637, %v749, 0
        %v759 = vsel %vm637, %v754, 0
        %761 = vmatprep.subr.bf16.mxu0 0
        %762 = vmatpush1.bf16.xpose.msra.mxu0 0
        %763 = vmatprep.subr.bf16.mxu0 0
        %764 = vmatpush1.bf16.xpose.msra.mxu0 0
        %765 = vmatprep.subr.bf16.mxu0 0
        %766 = vmatpush1.bf16.xpose.msra.mxu0 0
        %767 = vmatprep.subr.bf16.mxu0 0
        %768 = vmatpush1.bf16.xpose.msra.mxu0 0
        %769 = vmatprep.subr.bf16.mxu0 0
        %770 = vmatpush1.bf16.xpose.msra.mxu0 0
        %771 = vmatprep.subr.bf16.mxu0 0
        %772 = vmatpush1.bf16.xpose.msra.mxu0 0
        %773 = vmatprep.subr.bf16.mxu0 0
        %774 = vmatpush1.bf16.xpose.msra.mxu0 0
        %775 = vmatprep.subr.bf16.mxu0 0
        %776 = vmatpush1.bf16.xpose.msra.mxu0 %v759
        %777 = vmatprep.subr.bf16.mxu0 0
        %778 = vmatpush2.bf16.xpose.msra.mxu0 0
        %779 = vmatprep.subr.bf16.mxu0 0
        %780 = vmatpush2.bf16.xpose.msra.mxu0 0
        %781 = vmatprep.subr.bf16.mxu0 0
        %782 = vmatpush2.bf16.xpose.msra.mxu0 0
        %783 = vmatprep.subr.bf16.mxu0 0
        %784 = vmatpush2.bf16.xpose.msra.mxu0 0
        %785 = vmatprep.subr.bf16.mxu0 0
        %786 = vmatpush2.bf16.xpose.msra.mxu0 0
        %787 = vmatprep.subr.bf16.mxu0 0
        %788 = vmatpush2.bf16.xpose.msra.mxu0 0
        %789 = vmatprep.subr.bf16.mxu0 0
        %790 = vmatpush2.bf16.xpose.msra.mxu0 0
        %791 = vmatprep.subr.bf16.mxu0 0
        %792 = vmatpush2.bf16.xpose.msra.mxu0 0
        %793 = vmatprep.mubr.bf16.mxu0 0
        %794 = vmatmul.mubr.bf16.gmra.mxu0 %v756
        %v795 = vpop.f32.mrf.mxu0
        %v796 = vadd.f32 0.0, %v795
        %v797 = vpop.f32.mrf.mxu0
        %v798 = vpop.f32.mrf.mxu0
        %v799 = vpop.f32.mrf.mxu0
        %800 = vdwg.mxu0
        %v801 = vsel %vm684, %v796, -inf
        %802 = vmax.xlane.f32.xlu0 %v801
        %v803 = vpop.xlane.xlu0 %802
        %v804 = vsub.f32 %v796, %v803
        %v805 = vmul.f32 %v804, 1.442695
        %v806 = vpow.pop %v805
        %v807 = vsel %vm684, %v806, 0.0
        %808 = vadd.xlane.f32.xlu0 %v807
        %v809 = vpop.xlane.xlu0 %808
        %v810 = vrcp.pop %v809
        %v811 = vmul.f32 %v806, %v810
        %s812 = scalar_lea.vmem %s431, 8 [#allocation15]
        %813 = vst.msk [vmem:[%s812] sm:$0xff] %vm684, %v811
        %v814 = vpack.c.bf16 %v811, %v811
        %v816 = vunpack.c.l.b16 %v636
        %v817 = vpack.c.b16 %v816, %v816
        %818 = vrot.lane.b32.xlu0 %v817, 112
        %v819 = vpop.permute.xlu0 %818
        %v821 = vsel %vm684, %v814, 0
        %v824 = vsel %vm701, %v819, 0
        %826 = vmatprep.subr.bf16.mxu0 0
        %827 = vmatpush1.bf16.msra.mxu0 0
        %828 = vmatprep.subr.bf16.mxu0 0
        %829 = vmatpush1.bf16.msra.mxu0 0
        %830 = vmatprep.subr.bf16.mxu0 0
        %831 = vmatpush1.bf16.msra.mxu0 0
        %832 = vmatprep.subr.bf16.mxu0 0
        %833 = vmatpush1.bf16.msra.mxu0 0
        %834 = vmatprep.subr.bf16.mxu0 0
        %835 = vmatpush1.bf16.msra.mxu0 0
        %836 = vmatprep.subr.bf16.mxu0 0
        %837 = vmatpush1.bf16.msra.mxu0 0
        %838 = vmatprep.subr.bf16.mxu0 0
        %839 = vmatpush1.bf16.msra.mxu0 0
        %840 = vmatprep.subr.bf16.mxu0 0
        %841 = vmatpush1.bf16.msra.mxu0 %v824
        %842 = vmatprep.subr.bf16.mxu0 0
        %843 = vmatpush2.bf16.msra.mxu0 0
        %844 = vmatprep.subr.bf16.mxu0 0
        %845 = vmatpush2.bf16.msra.mxu0 0
        %846 = vmatprep.subr.bf16.mxu0 0
        %847 = vmatpush2.bf16.msra.mxu0 0
        %848 = vmatprep.subr.bf16.mxu0 0
        %849 = vmatpush2.bf16.msra.mxu0 0
        %850 = vmatprep.subr.bf16.mxu0 0
        %851 = vmatpush2.bf16.msra.mxu0 0
        %852 = vmatprep.subr.bf16.mxu0 0
        %853 = vmatpush2.bf16.msra.mxu0 0
        %854 = vmatprep.subr.bf16.mxu0 0
        %855 = vmatpush2.bf16.msra.mxu0 0
        %856 = vmatprep.subr.bf16.mxu0 0
        %857 = vmatpush2.bf16.msra.mxu0 0
        %858 = vmatprep.mubr.bf16.mxu0 0
        %859 = vmatmul.mubr.bf16.gmra.mxu0 %v821
        %v860 = vpop.f32.mrf.mxu0
        %v861 = vadd.f32 0.0, %v860
        %v862 = vpop.f32.mrf.mxu0
        %v863 = vpop.f32.mrf.mxu0
        %v864 = vpop.f32.mrf.mxu0
        %865 = vdwg.mxu0
        %v866 = vmul.f32 %v861, 0.125
        %868 = vrot.lane.b32.xlu0 %v866, 16
        %v869 = vpop.permute.xlu0 %868
        %vm871 = vcmask 261248
        %872 = vst.msk [vmem:[%s438] sm:$0xff] %vm871, %v869
        %873 = vrot.lane.b32.xlu0 %v634, 96
        %v874 = vpop.permute.xlu0 %873
        %875 = vrot.lane.b32.xlu0 %v752, 96
        %v876 = vpop.permute.xlu0 %875
        %v878 = vsel %vm637, %v874, 0
        %v881 = vsel %vm637, %v876, 0
        %883 = vmatprep.subr.bf16.mxu0 0
        %884 = vmatpush1.bf16.xpose.msra.mxu0 0
        %885 = vmatprep.subr.bf16.mxu0 0
        %886 = vmatpush1.bf16.xpose.msra.mxu0 0
        %887 = vmatprep.subr.bf16.mxu0 0
        %888 = vmatpush1.bf16.xpose.msra.mxu0 0
        %889 = vmatprep.subr.bf16.mxu0 0
        %890 = vmatpush1.bf16.xpose.msra.mxu0 0
        %891 = vmatprep.subr.bf16.mxu0 0
        %892 = vmatpush1.bf16.xpose.msra.mxu0 0
        %893 = vmatprep.subr.bf16.mxu0 0
        %894 = vmatpush1.bf16.xpose.msra.mxu0 0
        %895 = vmatprep.subr.bf16.mxu0 0
        %896 = vmatpush1.bf16.xpose.msra.mxu0 0
        %897 = vmatprep.subr.bf16.mxu0 0
        %898 = vmatpush1.bf16.xpose.msra.mxu0 %v881
        %899 = vmatprep.subr.bf16.mxu0 0
        %900 = vmatpush2.bf16.xpose.msra.mxu0 0
        %901 = vmatprep.subr.bf16.mxu0 0
        %902 = vmatpush2.bf16.xpose.msra.mxu0 0
        %903 = vmatprep.subr.bf16.mxu0 0
        %904 = vmatpush2.bf16.xpose.msra.mxu0 0
        %905 = vmatprep.subr.bf16.mxu0 0
        %906 = vmatpush2.bf16.xpose.msra.mxu0 0
        %907 = vmatprep.subr.bf16.mxu0 0
        %908 = vmatpush2.bf16.xpose.msra.mxu0 0
        %909 = vmatprep.subr.bf16.mxu0 0
        %910 = vmatpush2.bf16.xpose.msra.mxu0 0
        %911 = vmatprep.subr.bf16.mxu0 0
        %912 = vmatpush2.bf16.xpose.msra.mxu0 0
        %913 = vmatprep.subr.bf16.mxu0 0
        %914 = vmatpush2.bf16.xpose.msra.mxu0 0
        %915 = vmatprep.mubr.bf16.mxu0 0
        %916 = vmatmul.mubr.bf16.gmra.mxu0 %v878
        %v917 = vpop.f32.mrf.mxu0
        %v918 = vadd.f32 0.0, %v917
        %v919 = vpop.f32.mrf.mxu0
        %v920 = vpop.f32.mrf.mxu0
        %v921 = vpop.f32.mrf.mxu0
        %922 = vdwg.mxu0
        %v923 = vsel %vm684, %v918, -inf
        %924 = vmax.xlane.f32.xlu0 %v923
        %v925 = vpop.xlane.xlu0 %924
        %v926 = vsub.f32 %v918, %v925
        %v927 = vmul.f32 %v926, 1.442695
        %v928 = vpow.pop %v927
        %v929 = vsel %vm684, %v928, 0.0
        %930 = vadd.xlane.f32.xlu0 %v929
        %v931 = vpop.xlane.xlu0 %930
        %v932 = vrcp.pop %v931
        %v933 = vmul.f32 %v928, %v932
        %s934 = scalar_lea.vmem %s431, 16 [#allocation15]
        %935 = vst.msk [vmem:[%s934] sm:$0xff] %vm684, %v933
        %v936 = vpack.c.bf16 %v933, %v933
        %937 = vrot.lane.b32.xlu0 %v817, 96
        %v938 = vpop.permute.xlu0 %937
        %v940 = vsel %vm684, %v936, 0
        %v943 = vsel %vm701, %v938, 0
        %945 = vmatprep.subr.bf16.mxu0 0
        %946 = vmatpush1.bf16.msra.mxu0 0
        %947 = vmatprep.subr.bf16.mxu0 0
        %948 = vmatpush1.bf16.msra.mxu0 0
        %949 = vmatprep.subr.bf16.mxu0 0
        %950 = vmatpush1.bf16.msra.mxu0 0
        %951 = vmatprep.subr.bf16.mxu0 0
        %952 = vmatpush1.bf16.msra.mxu0 0
        %953 = vmatprep.subr.bf16.mxu0 0
        %954 = vmatpush1.bf16.msra.mxu0 0
        %955 = vmatprep.subr.bf16.mxu0 0
        %956 = vmatpush1.bf16.msra.mxu0 0
        %957 = vmatprep.subr.bf16.mxu0 0
        %958 = vmatpush1.bf16.msra.mxu0 0
        %959 = vmatprep.subr.bf16.mxu0 0
        %960 = vmatpush1.bf16.msra.mxu0 %v943
        %961 = vmatprep.subr.bf16.mxu0 0
        %962 = vmatpush2.bf16.msra.mxu0 0
        %963 = vmatprep.subr.bf16.mxu0 0
        %964 = vmatpush2.bf16.msra.mxu0 0
        %965 = vmatprep.subr.bf16.mxu0 0
        %966 = vmatpush2.bf16.msra.mxu0 0
        %967 = vmatprep.subr.bf16.mxu0 0
        %968 = vmatpush2.bf16.msra.mxu0 0
        %969 = vmatprep.subr.bf16.mxu0 0
        %970 = vmatpush2.bf16.msra.mxu0 0
        %971 = vmatprep.subr.bf16.mxu0 0
        %972 = vmatpush2.bf16.msra.mxu0 0
        %973 = vmatprep.subr.bf16.mxu0 0
        %974 = vmatpush2.bf16.msra.mxu0 0
        %975 = vmatprep.subr.bf16.mxu0 0
        %976 = vmatpush2.bf16.msra.mxu0 0
        %977 = vmatprep.mubr.bf16.mxu0 0
        %978 = vmatmul.mubr.bf16.gmra.mxu0 %v940
        %v979 = vpop.f32.mrf.mxu0
        %v980 = vadd.f32 0.0, %v979
        %v981 = vpop.f32.mrf.mxu0
        %v982 = vpop.f32.mrf.mxu0
        %v983 = vpop.f32.mrf.mxu0
        %984 = vdwg.mxu0
        %v985 = vmul.f32 %v980, 0.125
        %987 = vrot.lane.b32.xlu0 %v985, 32
        %v988 = vpop.permute.xlu0 %987
        %vm990 = vcmask 392448
        %991 = vst.msk [vmem:[%s438] sm:$0xff] %vm990, %v988
        %992 = vrot.lane.b32.xlu0 %v634, 80
        %v993 = vpop.permute.xlu0 %992
        %994 = vrot.lane.b32.xlu0 %v752, 80
        %v995 = vpop.permute.xlu0 %994
        %v997 = vsel %vm637, %v993, 0
        %v1000 = vsel %vm637, %v995, 0
        %1002 = vmatprep.subr.bf16.mxu0 0
        %1003 = vmatpush1.bf16.xpose.msra.mxu0 0
        %1004 = vmatprep.subr.bf16.mxu0 0
        %1005 = vmatpush1.bf16.xpose.msra.mxu0 0
        %1006 = vmatprep.subr.bf16.mxu0 0
        %1007 = vmatpush1.bf16.xpose.msra.mxu0 0
        %1008 = vmatprep.subr.bf16.mxu0 0
        %1009 = vmatpush1.bf16.xpose.msra.mxu0 0
        %1010 = vmatprep.subr.bf16.mxu0 0
        %1011 = vmatpush1.bf16.xpose.msra.mxu0 0
        %1012 = vmatprep.subr.bf16.mxu0 0
        %1013 = vmatpush1.bf16.xpose.msra.mxu0 0
        %1014 = vmatprep.subr.bf16.mxu0 0
        %1015 = vmatpush1.bf16.xpose.msra.mxu0 0
        %1016 = vmatprep.subr.bf16.mxu0 0
        %1017 = vmatpush1.bf16.xpose.msra.mxu0 %v1000
        %1018 = vmatprep.subr.bf16.mxu0 0
        %1019 = vmatpush2.bf16.xpose.msra.mxu0 0
        %1020 = vmatprep.subr.bf16.mxu0 0
        %1021 = vmatpush2.bf16.xpose.msra.mxu0 0
        %1022 = vmatprep.subr.bf16.mxu0 0
        %1023 = vmatpush2.bf16.xpose.msra.mxu0 0
        %1024 = vmatprep.subr.bf16.mxu0 0
        %1025 = vmatpush2.bf16.xpose.msra.mxu0 0
        %1026 = vmatprep.subr.bf16.mxu0 0
        %1027 = vmatpush2.bf16.xpose.msra.mxu0 0
        %1028 = vmatprep.subr.bf16.mxu0 0
        %1029 = vmatpush2.bf16.xpose.msra.mxu0 0
        %1030 = vmatprep.subr.bf16.mxu0 0
        %1031 = vmatpush2.bf16.xpose.msra.mxu0 0
        %1032 = vmatprep.subr.bf16.mxu0 0
        %1033 = vmatpush2.bf16.xpose.msra.mxu0 0
        %1034 = vmatprep.mubr.bf16.mxu0 0
        %1035 = vmatmul.mubr.bf16.gmra.mxu0 %v997
        %v1036 = vpop.f32.mrf.mxu0
        %v1037 = vadd.f32 0.0, %v1036
        %v1038 = vpop.f32.mrf.mxu0
        %v1039 = vpop.f32.mrf.mxu0
        %v1040 = vpop.f32.mrf.mxu0
        %1041 = vdwg.mxu0
        %v1042 = vsel %vm684, %v1037, -inf
        %1043 = vmax.xlane.f32.xlu0 %v1042
        %v1044 = vpop.xlane.xlu0 %1043
        %v1045 = vsub.f32 %v1037, %v1044
        %v1046 = vmul.f32 %v1045, 1.442695
        %v1047 = vpow.pop %v1046
        %v1048 = vsel %vm684, %v1047, 0.0
        %1049 = vadd.xlane.f32.xlu0 %v1048
        %v1050 = vpop.xlane.xlu0 %1049
        %v1051 = vrcp.pop %v1050
        %v1052 = vmul.f32 %v1047, %v1051
        %s1053 = scalar_lea.vmem %s431, 24 [#allocation15]
        %1054 = vst.msk [vmem:[%s1053] sm:$0xff] %vm684, %v1052
        %v1055 = vpack.c.bf16 %v1052, %v1052
        %1056 = vrot.lane.b32.xlu0 %v817, 80
        %v1057 = vpop.permute.xlu0 %1056
        %v1059 = vsel %vm684, %v1055, 0
        %v1062 = vsel %vm701, %v1057, 0
        %1064 = vmatprep.subr.bf16.mxu0 0
        %1065 = vmatpush1.bf16.msra.mxu0 0
        %1066 = vmatprep.subr.bf16.mxu0 0
        %1067 = vmatpush1.bf16.msra.mxu0 0
        %1068 = vmatprep.subr.bf16.mxu0 0
        %1069 = vmatpush1.bf16.msra.mxu0 0
        %1070 = vmatprep.subr.bf16.mxu0 0
        %1071 = vmatpush1.bf16.msra.mxu0 0
        %1072 = vmatprep.subr.bf16.mxu0 0
        %1073 = vmatpush1.bf16.msra.mxu0 0
        %1074 = vmatprep.subr.bf16.mxu0 0
        %1075 = vmatpush1.bf16.msra.mxu0 0
        %1076 = vmatprep.subr.bf16.mxu0 0
        %1077 = vmatpush1.bf16.msra.mxu0 0
        %1078 = vmatprep.subr.bf16.mxu0 0
        %1079 = vmatpush1.bf16.msra.mxu0 %v1062
        %1080 = vmatprep.subr.bf16.mxu0 0
        %1081 = vmatpush2.bf16.msra.mxu0 0
        %1082 = vmatprep.subr.bf16.mxu0 0
        %1083 = vmatpush2.bf16.msra.mxu0 0
        %1084 = vmatprep.subr.bf16.mxu0 0
        %1085 = vmatpush2.bf16.msra.mxu0 0
        %1086 = vmatprep.subr.bf16.mxu0 0
        %1087 = vmatpush2.bf16.msra.mxu0 0
        %1088 = vmatprep.subr.bf16.mxu0 0
        %1089 = vmatpush2.bf16.msra.mxu0 0
        %1090 = vmatprep.subr.bf16.mxu0 0
        %1091 = vmatpush2.bf16.msra.mxu0 0
        %1092 = vmatprep.subr.bf16.mxu0 0
        %1093 = vmatpush2.bf16.msra.mxu0 0
        %1094 = vmatprep.subr.bf16.mxu0 0
        %1095 = vmatpush2.bf16.msra.mxu0 0
        %1096 = vmatprep.mubr.bf16.mxu0 0
        %1097 = vmatmul.mubr.bf16.gmra.mxu0 %v1059
        %v1098 = vpop.f32.mrf.mxu0
        %v1099 = vadd.f32 0.0, %v1098
        %v1100 = vpop.f32.mrf.mxu0
        %v1101 = vpop.f32.mrf.mxu0
        %v1102 = vpop.f32.mrf.mxu0
        %1103 = vdwg.mxu0
        %v1104 = vmul.f32 %v1099, 0.125
        %1106 = vrot.lane.b32.xlu0 %v1104, 48
        %v1107 = vpop.permute.xlu0 %1106
        %vm1109 = vcmask 523648
        %1110 = vst.msk [vmem:[%s438] sm:$0xff] %vm1109, %v1107
        %s1111 = sand.u32 %s198, 1
        %s1112 = scalar_lea.sflag [#allocation6], %s1111
        %s1113 = sand.u32 %s198, 1
        %s1114 = smul.addr %s1113, 32
        %s1115 = scalar_lea.vmem [#allocation15], %s1114
        %s1116 = sand.u32 %s226, 1
        %s1117 = scalar_lea.sflag [#allocation17], %s1116
        %s1118 = sand.u32 %s226, 1
        %s1119 = smul.addr %s1118, 8
        %s1120 = scalar_lea.vmem [#allocation16], %s1119
        // Predicated region
        $region73: #{tpu_custom_call.1} parent=43 // pred_check
          %p1121 = pneg %p208
        $region74: #{tpu_custom_call.1} parent=43 // pred_check_branch
          %1123 = sbr.rel (%p1121) target = $region76
        $region75: #{tpu_custom_call.1} parent=43 // pred_region
          %s1125 = ssub.s32 512, 512
          %1126 = vsyncadd %s1112, %s1125
          %s1127 = smul.addr %s37, 4
          %s1128 = sadd.s32 %s38, %s1127
          %s1129 = smul.addr %s1128, 128
          %s1130 = scalar_lea.hbm %s6, %s1129
          %s1131 = sshll.u32 %s1115, 4
          %s1132 = int_to_ptr.vmem [resolvable:$true] %s1131
          %1137 = dma.vmem_to_hbm [thread:$0]  %s1132, 512, %s1130, %s1112, 128, 128, 8
        $region76: #{tpu_custom_call.1} parent=43 // pred_fallthru
          _
        // Predicated region
        $region77: #{tpu_custom_call.1} parent=43 // pred_check
          %p1138 = pneg %p236
        $region78: #{tpu_custom_call.1} parent=43 // pred_check_branch
          %1140 = sbr.rel (%p1138) target = $region80
        $region79: #{tpu_custom_call.1} parent=43 // pred_region
          %s1142 = ssub.s32 128, 128
          %1143 = vsyncadd %s1117, %s1142
          %s1144 = sadd.s32 %s38, %s37
          %s1145 = smul.addr %s1144, 128
          %s1146 = scalar_lea.hbm %s7, %s1145
          %s1148 = sshll.u32 %s1120, 4
          %s1149 = int_to_ptr.vmem [resolvable:$true] %s1148
          %1151 = dma.vmem_to_hbm [thread:$0]  %s1149, 128, %s1146, %s1117
        $region80: #{tpu_custom_call.1} parent=43 // pred_fallthru
          _
      $region44: #{tpu_custom_call.1} parent=5 // pred_fallthru
        _
      %p1152 = scmp.le.s32.totalorder 2, %s28
      // Predicated region
      $region81: #{tpu_custom_call.1} parent=5 // pred_check
        %p1153 = pneg %p1152
      $region82: #{tpu_custom_call.1} parent=5 // pred_check_branch
        %1155 = sbr.rel (%p1153) target = $region84
      $region83: #{tpu_custom_call.1} parent=5 // pred_region
        %s1156 = ssub.s32 %s28, 2
        // Predicated region
        $region85: #{tpu_custom_call.1} parent=83 // pred_check
          %p1157 = pneg %p214
        $region86: #{tpu_custom_call.1} parent=83 // pred_check_branch
          %1159 = sbr.rel (%p1157) target = $region88
        $region87: #{tpu_custom_call.1} parent=83 // pred_region
          %s1160 = sand.u32 %s199, 1
          %s1161 = scalar_lea.sflag [#allocation6], %s1160
          %s1162 = sand.u32 %s199, 1
          %s1163 = smul.addr %s1162, 32
          %s1164 = scalar_lea.vmem [#allocation15], %s1163
          %1165 = dma.done %s1161, 512
        $region88: #{tpu_custom_call.1} parent=83 // pred_fallthru
          _
        // Predicated region
        $region89: #{tpu_custom_call.1} parent=83 // pred_check
          %p1166 = pneg %p242
        $region90: #{tpu_custom_call.1} parent=83 // pred_check_branch
          %1168 = sbr.rel (%p1166) target = $region92
        $region91: #{tpu_custom_call.1} parent=83 // pred_region
          %s1169 = sand.u32 %s227, 1
          %s1170 = scalar_lea.sflag [#allocation17], %s1169
          %s1171 = sand.u32 %s227, 1
          %s1172 = smul.addr %s1171, 8
          %s1173 = scalar_lea.vmem [#allocation16], %s1172
          %1174 = dma.done %s1170, 128
        $region92: #{tpu_custom_call.1} parent=83 // pred_fallthru
          _
      $region84: #{tpu_custom_call.1} parent=5 // pred_fallthru
        _
    $region6: #{tpu_custom_call.1} parent=1 // loop_footer
      %s32 = sadd.s32 1, %s28
    $region7: #{tpu_custom_call.1} parent=1 // loop_footer_branch
      %27 = sbr.rel target = $region3
    $region8: #{tpu_custom_call.1} parent=1 // loop_exit
      _
    %1175 = vsyncpa [#allocation5], 1
    %s1176 = scalar_lea.sflag [#allocation5], 1
    %1177 = vsyncpa %s1176, 1
    %1178 = vsyncpa [#allocation8], 1
    %s1179 = scalar_lea.sflag [#allocation8], 1
    %1180 = vsyncpa %s1179, 1
    %1181 = vsyncpa [#allocation11], 1
    %1182 = vsyncpa [#allocation14], 1
    %1183 = vsyncpa [#allocation6], 1
    %s1184 = scalar_lea.sflag [#allocation6], 1
    %1185 = vsyncpa %s1184, 1
    %1186 = vsyncpa [#allocation17], 1
    %s1187 = scalar_lea.sflag [#allocation17], 1
    %1188 = vsyncpa %s1187, 1

</llo_original>
